<compile_context>
chip_gen: v5e
topology: v5e:2x2
jax: 0.10.0
libtpu: 0.0.40
codegen_flags: <defaults>
</compile_context>

<pallas_src>
import functools
import math

import jax
import jax.numpy as jnp
from jax.experimental import pallas as pl
from jax.experimental.pallas import tpu as pltpu

EPS = 1e-6  # LayerNorm eps from the reference module


# ----------------------------------------------------------------------------
# In-kernel helpers
# ----------------------------------------------------------------------------
def _layernorm_rows(x, a, b):
    """Row-wise LayerNorm matching the reference exactly:
    unbiased std (ddof=1), eps added to std (not variance). x:(R,D) f32, a/b:(1,D)."""
    d = x.shape[-1]
    mean = jnp.mean(x, axis=-1, keepdims=True)
    xc = x - mean
    var = jnp.sum(xc * xc, axis=-1, keepdims=True) * (1.0 / (d - 1))
    inv = pl.reciprocal(jnp.sqrt(var) + EPS, approx=True)   # EUP, frees VALU
    return a * xc * inv + b


# ----------------------------------------------------------------------------
# Pallas kernels (fused sublayers)
# ----------------------------------------------------------------------------
def _attn_sublayer_kernel(x_ref, mask_ref, ln_a_ref, ln_b_ref,
                          wqkv_ref, bqkv_ref, wo_ref, bo_ref, o_ref,
                          *, num_heads):
    """One batch element: out = x + Wo @ Attn(LN(x)) with fused QKV projection."""
    x = x_ref[0]                                     # (S, D) f32
    s_len, d_model = x.shape
    dk = d_model // num_heads

    xn = _layernorm_rows(x, ln_a_ref[...], ln_b_ref[...])

    # Fused QKV projection: bf16 MXU operands, f32 accumulation.
    qkv = jnp.dot(xn.astype(jnp.bfloat16), wqkv_ref[...],
                  preferred_element_type=jnp.float32) + bqkv_ref[...]   # (S, 3D) f32

    m = mask_ref[0]                                  # (1, S) -> broadcasts over queries
    inv_sqrt_dk = 1.0 / math.sqrt(dk)

    ctx_parts = []
    for h in range(num_heads):                       # static unroll over heads
        qh = qkv[:, h * dk:(h + 1) * dk].astype(jnp.bfloat16)                 # (S, dk)
        kh = qkv[:, d_model + h * dk:d_model + (h + 1) * dk].astype(jnp.bfloat16)
        vh = qkv[:, 2 * d_model + h * dk:2 * d_model + (h + 1) * dk].astype(jnp.bfloat16)

        # q @ k^T without materializing the transpose (contract both on last dim).
        sc = jax.lax.dot_general(qh, kh, (((1,), (1,)), ((), ())),
                                 preferred_element_type=jnp.float32)          # (S, S)
        sc = sc * inv_sqrt_dk
        sc = jnp.where(m == 0.0, jnp.float32(-1e9), sc)
        sc = sc - jnp.max(sc, axis=-1, keepdims=True)
        p = jnp.exp(sc)
        p = p * pl.reciprocal(jnp.sum(p, axis=-1, keepdims=True), approx=True)

        ctx_parts.append(jnp.dot(p.astype(jnp.bfloat16), vh,
                                 preferred_element_type=jnp.float32))         # (S, dk)

    ctx = jnp.concatenate(ctx_parts, axis=-1)        # (S, D) — lane-dense output path

    out = jnp.dot(ctx.astype(jnp.bfloat16), wo_ref[...],
                  preferred_element_type=jnp.float32) + bo_ref[...]
    o_ref[0] = x + out                               # residual folded into the store


def _ffn_sublayer_kernel(x_ref, ln_a_ref, ln_b_ref, w1_ref, b1_ref, w2_ref, b2_ref, o_ref):
    """out = x + W2 @ relu(W1 @ LN(x) + b1) + b2 on a (TILE_M, D) row tile."""
    x = x_ref[...]                                   # (TM, D) f32
    xn = _layernorm_rows(x, ln_a_ref[...], ln_b_ref[...])
    h = jnp.dot(xn.astype(jnp.bfloat16), w1_ref[...],
                preferred_element_type=jnp.float32) + b1_ref[...]
    h = jnp.maximum(h, 0.0)
    y = jnp.dot(h.astype(jnp.bfloat16), w2_ref[...],
                preferred_element_type=jnp.float32) + b2_ref[...]
    o_ref[...] = x + y                               # residual folded into the store


def _layernorm_kernel(x_ref, a_ref, b_ref, o_ref):
    o_ref[...] = _layernorm_rows(x_ref[...], a_ref[...], b_ref[...])


# ----------------------------------------------------------------------------
# Pallas wrappers
# ----------------------------------------------------------------------------
def _row_tile(m):
    # 256-row tiles: multiple of 8 sublanes, MXU-aligned (2x256^2) on v6e/v7x, and
    # keeps the weight-resident + double-buffered FFN footprint under the 32 MiB
    # default scoped-VMEM even on v7x (64 MiB physical).  Small inputs use the full
    # row extent (block == array dims satisfies the (8,128) rule).
    return m if m <= 256 else 256


def attention_sublayer(x, mask, lp, num_heads):
    """x: (B, S, D); mask: (B, 1, S).  Returns x + SelfAttn(LN1(x))."""
    B, S, D = x.shape
    wqkv = jnp.concatenate([lp["wq"], lp["wk"], lp["wv"]], axis=1).astype(jnp.bfloat16)
    bqkv = jnp.concatenate([lp["bq"], lp["bk"], lp["bv"]]).reshape(1, 3 * D)
    wo = lp["wo"].astype(jnp.bfloat16)
    bo = lp["bo"].reshape(1, D)

    kernel = functools.partial(_attn_sublayer_kernel, num_heads=num_heads)
    return pl.pallas_call(
        kernel,
        out_shape=jax.ShapeDtypeStruct((B, S, D), jnp.float32),
        grid=(B,),
        in_specs=[
            pl.BlockSpec((1, S, D), lambda b: (b, 0, 0)),      # x (pipelined over batch)
            pl.BlockSpec((1, 1, S), lambda b: (b, 0, 0)),      # mask
            pl.BlockSpec((1, D), lambda b: (0, 0)),            # ln1 a
            pl.BlockSpec((1, D), lambda b: (0, 0)),            # ln1 b
            pl.BlockSpec((D, 3 * D), lambda b: (0, 0)),        # fused QKV weight (bf16, resident)
            pl.BlockSpec((1, 3 * D), lambda b: (0, 0)),        # fused QKV bias
            pl.BlockSpec((D, D), lambda b: (0, 0)),            # output proj weight (bf16, resident)
            pl.BlockSpec((1, D), lambda b: (0, 0)),            # output proj bias
        ],
        out_specs=pl.BlockSpec((1, S, D), lambda b: (b, 0, 0)),
        compiler_params=pltpu.CompilerParams(dimension_semantics=("parallel",)),
    )(x, mask, lp["ln1_a"].reshape(1, D), lp["ln1_b"].reshape(1, D),
      wqkv, bqkv, wo, bo)


def ffn_sublayer(x, lp):
    """x: (B, S, D).  Returns x + FFN(LN2(x)), tiled over rows with resident weights."""
    B, S, D = x.shape
    M = B * S
    DFF = lp["w1"].shape[1]
    tm = _row_tile(M)
    out2d = pl.pallas_call(
        _ffn_sublayer_kernel,
        out_shape=jax.ShapeDtypeStruct((M, D), jnp.float32),
        grid=(pl.cdiv(M, tm),),
        in_specs=[
            pl.BlockSpec((tm, D), lambda i: (i, 0)),           # x row tile (double-buffered)
            pl.BlockSpec((1, D), lambda i: (0, 0)),            # ln2 a
            pl.BlockSpec((1, D), lambda i: (0, 0)),            # ln2 b
            pl.BlockSpec((D, DFF), lambda i: (0, 0)),          # w1 (bf16, resident)
            pl.BlockSpec((1, DFF), lambda i: (0, 0)),          # b1
            pl.BlockSpec((DFF, D), lambda i: (0, 0)),          # w2 (bf16, resident)
            pl.BlockSpec((1, D), lambda i: (0, 0)),            # b2
        ],
        out_specs=pl.BlockSpec((tm, D), lambda i: (i, 0)),
        compiler_params=pltpu.CompilerParams(dimension_semantics=("parallel",)),
    )(x.reshape(M, D),
      lp["ln2_a"].reshape(1, D), lp["ln2_b"].reshape(1, D),
      lp["w1"].astype(jnp.bfloat16), lp["b1"].reshape(1, DFF),
      lp["w2"].astype(jnp.bfloat16), lp["b2"].reshape(1, D))
    return out2d.reshape(B, S, D)


def layernorm(x, a, b):
    B, S, D = x.shape
    M = B * S
    tm = _row_tile(M)
    out2d = pl.pallas_call(
        _layernorm_kernel,
        out_shape=jax.ShapeDtypeStruct((M, D), jnp.float32),
        grid=(pl.cdiv(M, tm),),
        in_specs=[
            pl.BlockSpec((tm, D), lambda i: (i, 0)),
            pl.BlockSpec((1, D), lambda i: (0, 0)),
            pl.BlockSpec((1, D), lambda i: (0, 0)),
        ],
        out_specs=pl.BlockSpec((tm, D), lambda i: (i, 0)),
        compiler_params=pltpu.CompilerParams(dimension_semantics=("parallel",)),
    )(x.reshape(M, D), a.reshape(1, D), b.reshape(1, D))
    return out2d.reshape(B, S, D)


# ----------------------------------------------------------------------------
# Model glue (plain JAX: parameter plumbing only — residuals live in-kernel)
# ----------------------------------------------------------------------------
def encoder_forward(params, x, mask, num_heads):
    """x: (B, S, D); mask: (B, 1, S).  Mirrors Encoder.forward: stack of layers + final LN."""
    for lp in params["layers"]:
        x = attention_sublayer(x, mask, lp, num_heads)   # x + SelfAttn(LN1(x))
        x = ffn_sublayer(x, lp)                          # x + FFN(LN2(x))
    return layernorm(x, params["norm_a"], params["norm_b"])


def init_params(key, n_layers, d_model, d_ff):
    def lin_init(k, fan_in, fan_out):
        kw, kb = jax.random.split(k)
        lim = 1.0 / jnp.sqrt(jnp.float32(fan_in))
        w = jax.random.uniform(kw, (fan_in, fan_out), jnp.float32, -lim, lim)
        b = jax.random.uniform(kb, (fan_out,), jnp.float32, -lim, lim)
        return w, b

    layers = []
    for _ in range(n_layers):
        keys = jax.random.split(key, 7)
        key = keys[0]
        wq, bq = lin_init(keys[1], d_model, d_model)
        wk, bk = lin_init(keys[2], d_model, d_model)
        wv, bv = lin_init(keys[3], d_model, d_model)
        wo, bo = lin_init(keys[4], d_model, d_model)
        w1, b1 = lin_init(keys[5], d_model, d_ff)
        w2, b2 = lin_init(keys[6], d_ff, d_model)
        layers.append(dict(
            wq=wq, bq=bq, wk=wk, bk=bk, wv=wv, bv=bv, wo=wo, bo=bo,
            w1=w1, b1=b1, w2=w2, b2=b2,
            # LayerNorm params init exactly as in the reference: ones / zeros
            ln1_a=jnp.ones((d_model,), jnp.float32), ln1_b=jnp.zeros((d_model,), jnp.float32),
            ln2_a=jnp.ones((d_model,), jnp.float32), ln2_b=jnp.zeros((d_model,), jnp.float32),
        ))
    return dict(
        layers=layers,
        norm_a=jnp.ones((d_model,), jnp.float32),
        norm_b=jnp.zeros((d_model,), jnp.float32),
    )


if __name__ == "__main__":
    B, S, D, H, DFF, N = 2, 8, 32, 4, 64, 2

    key = jax.random.PRNGKey(0)
    kx, kp = jax.random.split(key)
    x = jax.random.normal(kx, (B, S, D), jnp.float32)
    # mask: (B, 1, S) — 1.0 = attend, 0.0 = masked; batch 1 has last 2 positions masked
    mask = jnp.ones((B, 1, S), jnp.float32).at[1, 0, -2:].set(0.0)

    params = init_params(kp, N, D, DFF)

    fwd = jax.jit(functools.partial(encoder_forward, num_heads=H))
    out = fwd(params, x, mask)
    out = jax.block_until_ready(out)

    assert out.shape == (B, S, D) and out.dtype == jnp.float32
    assert bool(jnp.all(jnp.isfinite(out)))
    print("KERNEL_OK")
</pallas_src>

<mosaic_0001>
module attributes {stable_mosaic.version = 11 : i64} {
  func.func @_attn_sublayer_kernel(%arg0: i32, %arg1: memref<1x8x32xf32, #tpu.memory_space<vmem>>, %arg2: memref<1x1x8xf32, #tpu.memory_space<vmem>>, %arg3: memref<1x32xf32, #tpu.memory_space<vmem>>, %arg4: memref<1x32xf32, #tpu.memory_space<vmem>>, %arg5: memref<32x96xbf16, #tpu.memory_space<vmem>>, %arg6: memref<1x96xf32, #tpu.memory_space<vmem>>, %arg7: memref<32x32xbf16, #tpu.memory_space<vmem>>, %arg8: memref<1x32xf32, #tpu.memory_space<vmem>>, %arg9: memref<1x8x32xf32, #tpu.memory_space<vmem>>) attributes {dimension_semantics = [#tpu.dimension_semantics<parallel>], iteration_bounds = array<i64: 2>, scalar_prefetch = 0 : i64, scratch_operands = 0 : i64, tpu.core_type = #tpu.core_type<tc>, window_params = [{transform_indices = @transform_0, window_bounds = array<i64: 1, 8, 32>}, {transform_indices = @transform_1, window_bounds = array<i64: 1, 1, 8>}, {pipeline_mode = #tpu.pipeline_mode<synchronous>, transform_indices = @transform_2, window_bounds = array<i64: 1, 32>}, {pipeline_mode = #tpu.pipeline_mode<synchronous>, transform_indices = @transform_3, window_bounds = array<i64: 1, 32>}, {pipeline_mode = #tpu.pipeline_mode<synchronous>, transform_indices = @transform_4, window_bounds = array<i64: 32, 96>}, {pipeline_mode = #tpu.pipeline_mode<synchronous>, transform_indices = @transform_5, window_bounds = array<i64: 1, 96>}, {pipeline_mode = #tpu.pipeline_mode<synchronous>, transform_indices = @transform_6, window_bounds = array<i64: 32, 32>}, {pipeline_mode = #tpu.pipeline_mode<synchronous>, transform_indices = @transform_7, window_bounds = array<i64: 1, 32>}, {transform_indices = @transform_8, window_bounds = array<i64: 1, 8, 32>}]} {
    %c0 = arith.constant 0 : index
    %c0_0 = arith.constant 0 : index
    %c0_1 = arith.constant 0 : index
    %0 = vector.load %arg1[%c0, %c0_0, %c0_1] : memref<1x8x32xf32, #tpu.memory_space<vmem>>, vector<1x8x32xf32>
    %1 = vector.shape_cast %0 : vector<1x8x32xf32> to vector<8x32xf32>
    %c0_2 = arith.constant 0 : index
    %c0_3 = arith.constant 0 : index
    %2 = vector.load %arg3[%c0_2, %c0_3] : memref<1x32xf32, #tpu.memory_space<vmem>>, vector<1x32xf32>
    %c0_4 = arith.constant 0 : index
    %c0_5 = arith.constant 0 : index
    %3 = vector.load %arg4[%c0_4, %c0_5] : memref<1x32xf32, #tpu.memory_space<vmem>>, vector<1x32xf32>
    %cst = arith.constant dense<0.000000e+00> : vector<8xf32>
    %4 = vector.multi_reduction <add>, %1, %cst [1] : vector<8x32xf32> to vector<8xf32>
    %5 = vector.shape_cast %4 : vector<8xf32> to vector<8x1xf32>
    %cst_6 = arith.constant 3.200000e+01 : f32
    %6 = vector.broadcast %cst_6 : f32 to vector<8x1xf32>
    %7 = arith.divf %5, %6 : vector<8x1xf32>
    %8 = vector.broadcast %7 : vector<8x1xf32> to vector<8x32xf32>
    %9 = arith.subf %1, %8 : vector<8x32xf32>
    %10 = arith.mulf %9, %9 : vector<8x32xf32>
    %cst_7 = arith.constant dense<0.000000e+00> : vector<8xf32>
    %11 = vector.multi_reduction <add>, %10, %cst_7 [1] : vector<8x32xf32> to vector<8xf32>
    %12 = vector.shape_cast %11 : vector<8xf32> to vector<8x1xf32>
    %cst_8 = arith.constant 0.0322580636 : f32
    %13 = vector.broadcast %cst_8 : f32 to vector<8x1xf32>
    %14 = arith.mulf %12, %13 : vector<8x1xf32>
    %15 = math.sqrt %14 : vector<8x1xf32>
    %cst_9 = arith.constant 9.99999997E-7 : f32
    %16 = vector.broadcast %cst_9 : f32 to vector<8x1xf32>
    %17 = arith.addf %15, %16 : vector<8x1xf32>
    %18 = tpu.reciprocal %17 {approx = true} : vector<8x1xf32> -> vector<8x1xf32>
    %19 = vector.broadcast %2 : vector<1x32xf32> to vector<8x32xf32>
    %20 = arith.mulf %19, %9 : vector<8x32xf32>
    %21 = vector.broadcast %18 : vector<8x1xf32> to vector<8x32xf32>
    %22 = arith.mulf %20, %21 : vector<8x32xf32>
    %23 = vector.broadcast %3 : vector<1x32xf32> to vector<8x32xf32>
    %24 = arith.addf %22, %23 : vector<8x32xf32>
    %25 = arith.truncf %24 : vector<8x32xf32> to vector<8x32xbf16>
    %c0_10 = arith.constant 0 : index
    %c0_11 = arith.constant 0 : index
    %26 = vector.load %arg5[%c0_10, %c0_11] : memref<32x96xbf16, #tpu.memory_space<vmem>>, vector<32x96xbf16>
    %cst_12 = arith.constant dense<0.000000e+00> : vector<8x96xf32>
    %27 = tpu.matmul %25, %26, %cst_12 {dimension_numbers = #tpu.dot_dimension_numbers<[1], [0], [0], [1], [0, 0, 1, 1], [], []>} : vector<8x32xbf16>, vector<32x96xbf16>, vector<8x96xf32> -> vector<8x96xf32>
    %c0_13 = arith.constant 0 : index
    %c0_14 = arith.constant 0 : index
    %28 = vector.load %arg6[%c0_13, %c0_14] : memref<1x96xf32, #tpu.memory_space<vmem>>, vector<1x96xf32>
    %29 = vector.broadcast %28 : vector<1x96xf32> to vector<8x96xf32>
    %30 = arith.addf %27, %29 : vector<8x96xf32>
    %c0_15 = arith.constant 0 : index
    %c0_16 = arith.constant 0 : index
    %c0_17 = arith.constant 0 : index
    %31 = vector.load %arg2[%c0_15, %c0_16, %c0_17] : memref<1x1x8xf32, #tpu.memory_space<vmem>>, vector<1x1x8xf32>
    %32 = vector.shape_cast %31 : vector<1x1x8xf32> to vector<1x8xf32>
    %33 = vector.extract_strided_slice %30 {offsets = [0, 0], sizes = [8, 8], strides = [1, 1]} : vector<8x96xf32> to vector<8x8xf32>
    %34 = arith.truncf %33 : vector<8x8xf32> to vector<8x8xbf16>
    %35 = vector.extract_strided_slice %30 {offsets = [0, 32], sizes = [8, 8], strides = [1, 1]} : vector<8x96xf32> to vector<8x8xf32>
    %36 = arith.truncf %35 : vector<8x8xf32> to vector<8x8xbf16>
    %37 = vector.extract_strided_slice %30 {offsets = [0, 64], sizes = [8, 8], strides = [1, 1]} : vector<8x96xf32> to vector<8x8xf32>
    %38 = arith.truncf %37 : vector<8x8xf32> to vector<8x8xbf16>
    %cst_18 = arith.constant dense<0.000000e+00> : vector<8x8xf32>
    %39 = tpu.matmul %34, %36, %cst_18 {dimension_numbers = #tpu.dot_dimension_numbers<[1], [1], [0], [0], [0, 0, 1, 0], [], []>} : vector<8x8xbf16>, vector<8x8xbf16>, vector<8x8xf32> -> vector<8x8xf32>
    %cst_19 = arith.constant 0.353553385 : f32
    %40 = vector.broadcast %cst_19 : f32 to vector<8x8xf32>
    %41 = arith.mulf %39, %40 : vector<8x8xf32>
    %cst_20 = arith.constant 0.000000e+00 : f32
    %42 = vector.broadcast %cst_20 : f32 to vector<1x8xf32>
    %43 = arith.cmpf oeq, %32, %42 : vector<1x8xf32>
    %cst_21 = arith.constant -1.000000e+09 : f32
    %44 = vector.shape_cast %43 : vector<1x8xi1> to vector<1x8xi1>
    %45 = vector.broadcast %44 : vector<1x8xi1> to vector<8x8xi1>
    %46 = vector.broadcast %cst_21 : f32 to vector<8x8xf32>
    %47 = arith.select %45, %46, %41 : vector<8x8xi1>, vector<8x8xf32>
    %cst_22 = arith.constant dense<0xFF800000> : vector<8xf32>
    %48 = vector.multi_reduction <maximumf>, %47, %cst_22 [1] : vector<8x8xf32> to vector<8xf32>
    %49 = vector.shape_cast %48 : vector<8xf32> to vector<8x1xf32>
    %50 = vector.broadcast %49 : vector<8x1xf32> to vector<8x8xf32>
    %51 = arith.subf %47, %50 : vector<8x8xf32>
    %52 = math.exp %51 : vector<8x8xf32>
    %cst_23 = arith.constant dense<0.000000e+00> : vector<8xf32>
    %53 = vector.multi_reduction <add>, %52, %cst_23 [1] : vector<8x8xf32> to vector<8xf32>
    %54 = vector.shape_cast %53 : vector<8xf32> to vector<8x1xf32>
    %55 = tpu.reciprocal %54 {approx = true} : vector<8x1xf32> -> vector<8x1xf32>
    %56 = vector.broadcast %55 : vector<8x1xf32> to vector<8x8xf32>
    %57 = arith.mulf %52, %56 : vector<8x8xf32>
    %58 = arith.truncf %57 : vector<8x8xf32> to vector<8x8xbf16>
    %cst_24 = arith.constant dense<0.000000e+00> : vector<8x8xf32>
    %59 = tpu.matmul %58, %38, %cst_24 {dimension_numbers = #tpu.dot_dimension_numbers<[1], [0], [0], [1], [0, 0, 1, 1], [], []>} : vector<8x8xbf16>, vector<8x8xbf16>, vector<8x8xf32> -> vector<8x8xf32>
    %60 = vector.extract_strided_slice %30 {offsets = [0, 8], sizes = [8, 8], strides = [1, 1]} : vector<8x96xf32> to vector<8x8xf32>
    %61 = arith.truncf %60 : vector<8x8xf32> to vector<8x8xbf16>
    %62 = vector.extract_strided_slice %30 {offsets = [0, 40], sizes = [8, 8], strides = [1, 1]} : vector<8x96xf32> to vector<8x8xf32>
    %63 = arith.truncf %62 : vector<8x8xf32> to vector<8x8xbf16>
    %64 = vector.extract_strided_slice %30 {offsets = [0, 72], sizes = [8, 8], strides = [1, 1]} : vector<8x96xf32> to vector<8x8xf32>
    %65 = arith.truncf %64 : vector<8x8xf32> to vector<8x8xbf16>
    %cst_25 = arith.constant dense<0.000000e+00> : vector<8x8xf32>
    %66 = tpu.matmul %61, %63, %cst_25 {dimension_numbers = #tpu.dot_dimension_numbers<[1], [1], [0], [0], [0, 0, 1, 0], [], []>} : vector<8x8xbf16>, vector<8x8xbf16>, vector<8x8xf32> -> vector<8x8xf32>
    %cst_26 = arith.constant 0.353553385 : f32
    %67 = vector.broadcast %cst_26 : f32 to vector<8x8xf32>
    %68 = arith.mulf %66, %67 : vector<8x8xf32>
    %cst_27 = arith.constant 0.000000e+00 : f32
    %69 = vector.broadcast %cst_27 : f32 to vector<1x8xf32>
    %70 = arith.cmpf oeq, %32, %69 : vector<1x8xf32>
    %cst_28 = arith.constant -1.000000e+09 : f32
    %71 = vector.shape_cast %70 : vector<1x8xi1> to vector<1x8xi1>
    %72 = vector.broadcast %71 : vector<1x8xi1> to vector<8x8xi1>
    %73 = vector.broadcast %cst_28 : f32 to vector<8x8xf32>
    %74 = arith.select %72, %73, %68 : vector<8x8xi1>, vector<8x8xf32>
    %cst_29 = arith.constant dense<0xFF800000> : vector<8xf32>
    %75 = vector.multi_reduction <maximumf>, %74, %cst_29 [1] : vector<8x8xf32> to vector<8xf32>
    %76 = vector.shape_cast %75 : vector<8xf32> to vector<8x1xf32>
    %77 = vector.broadcast %76 : vector<8x1xf32> to vector<8x8xf32>
    %78 = arith.subf %74, %77 : vector<8x8xf32>
    %79 = math.exp %78 : vector<8x8xf32>
    %cst_30 = arith.constant dense<0.000000e+00> : vector<8xf32>
    %80 = vector.multi_reduction <add>, %79, %cst_30 [1] : vector<8x8xf32> to vector<8xf32>
    %81 = vector.shape_cast %80 : vector<8xf32> to vector<8x1xf32>
    %82 = tpu.reciprocal %81 {approx = true} : vector<8x1xf32> -> vector<8x1xf32>
    %83 = vector.broadcast %82 : vector<8x1xf32> to vector<8x8xf32>
    %84 = arith.mulf %79, %83 : vector<8x8xf32>
    %85 = arith.truncf %84 : vector<8x8xf32> to vector<8x8xbf16>
    %cst_31 = arith.constant dense<0.000000e+00> : vector<8x8xf32>
    %86 = tpu.matmul %85, %65, %cst_31 {dimension_numbers = #tpu.dot_dimension_numbers<[1], [0], [0], [1], [0, 0, 1, 1], [], []>} : vector<8x8xbf16>, vector<8x8xbf16>, vector<8x8xf32> -> vector<8x8xf32>
    %87 = vector.extract_strided_slice %30 {offsets = [0, 16], sizes = [8, 8], strides = [1, 1]} : vector<8x96xf32> to vector<8x8xf32>
    %88 = arith.truncf %87 : vector<8x8xf32> to vector<8x8xbf16>
    %89 = vector.extract_strided_slice %30 {offsets = [0, 48], sizes = [8, 8], strides = [1, 1]} : vector<8x96xf32> to vector<8x8xf32>
    %90 = arith.truncf %89 : vector<8x8xf32> to vector<8x8xbf16>
    %91 = vector.extract_strided_slice %30 {offsets = [0, 80], sizes = [8, 8], strides = [1, 1]} : vector<8x96xf32> to vector<8x8xf32>
    %92 = arith.truncf %91 : vector<8x8xf32> to vector<8x8xbf16>
    %cst_32 = arith.constant dense<0.000000e+00> : vector<8x8xf32>
    %93 = tpu.matmul %88, %90, %cst_32 {dimension_numbers = #tpu.dot_dimension_numbers<[1], [1], [0], [0], [0, 0, 1, 0], [], []>} : vector<8x8xbf16>, vector<8x8xbf16>, vector<8x8xf32> -> vector<8x8xf32>
    %cst_33 = arith.constant 0.353553385 : f32
    %94 = vector.broadcast %cst_33 : f32 to vector<8x8xf32>
    %95 = arith.mulf %93, %94 : vector<8x8xf32>
    %cst_34 = arith.constant 0.000000e+00 : f32
    %96 = vector.broadcast %cst_34 : f32 to vector<1x8xf32>
    %97 = arith.cmpf oeq, %32, %96 : vector<1x8xf32>
    %cst_35 = arith.constant -1.000000e+09 : f32
    %98 = vector.shape_cast %97 : vector<1x8xi1> to vector<1x8xi1>
    %99 = vector.broadcast %98 : vector<1x8xi1> to vector<8x8xi1>
    %100 = vector.broadcast %cst_35 : f32 to vector<8x8xf32>
    %101 = arith.select %99, %100, %95 : vector<8x8xi1>, vector<8x8xf32>
    %cst_36 = arith.constant dense<0xFF800000> : vector<8xf32>
    %102 = vector.multi_reduction <maximumf>, %101, %cst_36 [1] : vector<8x8xf32> to vector<8xf32>
    %103 = vector.shape_cast %102 : vector<8xf32> to vector<8x1xf32>
    %104 = vector.broadcast %103 : vector<8x1xf32> to vector<8x8xf32>
    %105 = arith.subf %101, %104 : vector<8x8xf32>
    %106 = math.exp %105 : vector<8x8xf32>
    %cst_37 = arith.constant dense<0.000000e+00> : vector<8xf32>
    %107 = vector.multi_reduction <add>, %106, %cst_37 [1] : vector<8x8xf32> to vector<8xf32>
    %108 = vector.shape_cast %107 : vector<8xf32> to vector<8x1xf32>
    %109 = tpu.reciprocal %108 {approx = true} : vector<8x1xf32> -> vector<8x1xf32>
    %110 = vector.broadcast %109 : vector<8x1xf32> to vector<8x8xf32>
    %111 = arith.mulf %106, %110 : vector<8x8xf32>
    %112 = arith.truncf %111 : vector<8x8xf32> to vector<8x8xbf16>
    %cst_38 = arith.constant dense<0.000000e+00> : vector<8x8xf32>
    %113 = tpu.matmul %112, %92, %cst_38 {dimension_numbers = #tpu.dot_dimension_numbers<[1], [0], [0], [1], [0, 0, 1, 1], [], []>} : vector<8x8xbf16>, vector<8x8xbf16>, vector<8x8xf32> -> vector<8x8xf32>
    %114 = vector.extract_strided_slice %30 {offsets = [0, 24], sizes = [8, 8], strides = [1, 1]} : vector<8x96xf32> to vector<8x8xf32>
    %115 = arith.truncf %114 : vector<8x8xf32> to vector<8x8xbf16>
    %116 = vector.extract_strided_slice %30 {offsets = [0, 56], sizes = [8, 8], strides = [1, 1]} : vector<8x96xf32> to vector<8x8xf32>
    %117 = arith.truncf %116 : vector<8x8xf32> to vector<8x8xbf16>
    %118 = vector.extract_strided_slice %30 {offsets = [0, 88], sizes = [8, 8], strides = [1, 1]} : vector<8x96xf32> to vector<8x8xf32>
    %119 = arith.truncf %118 : vector<8x8xf32> to vector<8x8xbf16>
    %cst_39 = arith.constant dense<0.000000e+00> : vector<8x8xf32>
    %120 = tpu.matmul %115, %117, %cst_39 {dimension_numbers = #tpu.dot_dimension_numbers<[1], [1], [0], [0], [0, 0, 1, 0], [], []>} : vector<8x8xbf16>, vector<8x8xbf16>, vector<8x8xf32> -> vector<8x8xf32>
    %cst_40 = arith.constant 0.353553385 : f32
    %121 = vector.broadcast %cst_40 : f32 to vector<8x8xf32>
    %122 = arith.mulf %120, %121 : vector<8x8xf32>
    %cst_41 = arith.constant 0.000000e+00 : f32
    %123 = vector.broadcast %cst_41 : f32 to vector<1x8xf32>
    %124 = arith.cmpf oeq, %32, %123 : vector<1x8xf32>
    %cst_42 = arith.constant -1.000000e+09 : f32
    %125 = vector.shape_cast %124 : vector<1x8xi1> to vector<1x8xi1>
    %126 = vector.broadcast %125 : vector<1x8xi1> to vector<8x8xi1>
    %127 = vector.broadcast %cst_42 : f32 to vector<8x8xf32>
    %128 = arith.select %126, %127, %122 : vector<8x8xi1>, vector<8x8xf32>
    %cst_43 = arith.constant dense<0xFF800000> : vector<8xf32>
    %129 = vector.multi_reduction <maximumf>, %128, %cst_43 [1] : vector<8x8xf32> to vector<8xf32>
    %130 = vector.shape_cast %129 : vector<8xf32> to vector<8x1xf32>
    %131 = vector.broadcast %130 : vector<8x1xf32> to vector<8x8xf32>
    %132 = arith.subf %128, %131 : vector<8x8xf32>
    %133 = math.exp %132 : vector<8x8xf32>
    %cst_44 = arith.constant dense<0.000000e+00> : vector<8xf32>
    %134 = vector.multi_reduction <add>, %133, %cst_44 [1] : vector<8x8xf32> to vector<8xf32>
    %135 = vector.shape_cast %134 : vector<8xf32> to vector<8x1xf32>
    %136 = tpu.reciprocal %135 {approx = true} : vector<8x1xf32> -> vector<8x1xf32>
    %137 = vector.broadcast %136 : vector<8x1xf32> to vector<8x8xf32>
    %138 = arith.mulf %133, %137 : vector<8x8xf32>
    %139 = arith.truncf %138 : vector<8x8xf32> to vector<8x8xbf16>
    %cst_45 = arith.constant dense<0.000000e+00> : vector<8x8xf32>
    %140 = tpu.matmul %139, %119, %cst_45 {dimension_numbers = #tpu.dot_dimension_numbers<[1], [0], [0], [1], [0, 0, 1, 1], [], []>} : vector<8x8xbf16>, vector<8x8xbf16>, vector<8x8xf32> -> vector<8x8xf32>
    %141 = tpu.concatenate %59, %86, %113, %140 in 1 : vector<8x8xf32>, vector<8x8xf32>, vector<8x8xf32>, vector<8x8xf32> -> vector<8x32xf32>
    %142 = arith.truncf %141 : vector<8x32xf32> to vector<8x32xbf16>
    %c0_46 = arith.constant 0 : index
    %c0_47 = arith.constant 0 : index
    %143 = vector.load %arg7[%c0_46, %c0_47] : memref<32x32xbf16, #tpu.memory_space<vmem>>, vector<32x32xbf16>
    %cst_48 = arith.constant dense<0.000000e+00> : vector<8x32xf32>
    %144 = tpu.matmul %142, %143, %cst_48 {dimension_numbers = #tpu.dot_dimension_numbers<[1], [0], [0], [1], [0, 0, 1, 1], [], []>} : vector<8x32xbf16>, vector<32x32xbf16>, vector<8x32xf32> -> vector<8x32xf32>
    %c0_49 = arith.constant 0 : index
    %c0_50 = arith.constant 0 : index
    %145 = vector.load %arg8[%c0_49, %c0_50] : memref<1x32xf32, #tpu.memory_space<vmem>>, vector<1x32xf32>
    %146 = vector.broadcast %145 : vector<1x32xf32> to vector<8x32xf32>
    %147 = arith.addf %144, %146 : vector<8x32xf32>
    %148 = arith.addf %1, %147 : vector<8x32xf32>
    %c0_51 = arith.constant 0 : index
    %c0_52 = arith.constant 0 : index
    %c0_53 = arith.constant 0 : index
    %149 = vector.load %arg9[%c0_51, %c0_52, %c0_53] : memref<1x8x32xf32, #tpu.memory_space<vmem>>, vector<1x8x32xf32>
    %150 = vector.shape_cast %149 : vector<1x8x32xf32> to vector<8x32xf32>
    %151 = vector.shape_cast %148 : vector<8x32xf32> to vector<1x8x32xf32>
    tpu.vector_store %arg9[%c0_51, %c0_52, %c0_53], %151 {strides = array<i32>} : memref<1x8x32xf32, #tpu.memory_space<vmem>>, vector<1x8x32xf32>,
    return
  }
  func.func @transform_0(%arg0: i32) -> (i32, i32, i32) {
    %c0_i32 = arith.constant 0 : i32
    %c0_i32_0 = arith.constant 0 : i32
    %c0_i32_1 = arith.constant 0 : i32
    return %arg0, %c0_i32, %c0_i32_0 : i32, i32, i32
  }
  func.func @transform_1(%arg0: i32) -> (i32, i32, i32) {
    %c0_i32 = arith.constant 0 : i32
    %c0_i32_0 = arith.constant 0 : i32
    %c0_i32_1 = arith.constant 0 : i32
    return %arg0, %c0_i32, %c0_i32_0 : i32, i32, i32
  }
  func.func @transform_2(%arg0: i32) -> (i32, i32) {
    %c0_i32 = arith.constant 0 : i32
    %c0_i32_0 = arith.constant 0 : i32
    %c0_i32_1 = arith.constant 0 : i32
    return %c0_i32, %c0_i32_0 : i32, i32
  }
  func.func @transform_3(%arg0: i32) -> (i32, i32) {
    %c0_i32 = arith.constant 0 : i32
    %c0_i32_0 = arith.constant 0 : i32
    %c0_i32_1 = arith.constant 0 : i32
    return %c0_i32, %c0_i32_0 : i32, i32
  }
  func.func @transform_4(%arg0: i32) -> (i32, i32) {
    %c0_i32 = arith.constant 0 : i32
    %c0_i32_0 = arith.constant 0 : i32
    %c0_i32_1 = arith.constant 0 : i32
    return %c0_i32, %c0_i32_0 : i32, i32
  }
  func.func @transform_5(%arg0: i32) -> (i32, i32) {
    %c0_i32 = arith.constant 0 : i32
    %c0_i32_0 = arith.constant 0 : i32
    %c0_i32_1 = arith.constant 0 : i32
    return %c0_i32, %c0_i32_0 : i32, i32
  }
  func.func @transform_6(%arg0: i32) -> (i32, i32) {
    %c0_i32 = arith.constant 0 : i32
    %c0_i32_0 = arith.constant 0 : i32
    %c0_i32_1 = arith.constant 0 : i32
    return %c0_i32, %c0_i32_0 : i32, i32
  }
  func.func @transform_7(%arg0: i32) -> (i32, i32) {
    %c0_i32 = arith.constant 0 : i32
    %c0_i32_0 = arith.constant 0 : i32
    %c0_i32_1 = arith.constant 0 : i32
    return %c0_i32, %c0_i32_0 : i32, i32
  }
  func.func @transform_8(%arg0: i32) -> (i32, i32, i32) {
    %c0_i32 = arith.constant 0 : i32
    %c0_i32_0 = arith.constant 0 : i32
    %c0_i32_1 = arith.constant 0 : i32
    return %arg0, %c0_i32, %c0_i32_0 : i32, i32, i32
  }
}

module attributes {stable_mosaic.version = 11 : i64} {
  func.func @_ffn_sublayer_kernel(%arg0: i32, %arg1: memref<16x32xf32, #tpu.memory_space<vmem>>, %arg2: memref<1x32xf32, #tpu.memory_space<vmem>>, %arg3: memref<1x32xf32, #tpu.memory_space<vmem>>, %arg4: memref<32x64xbf16, #tpu.memory_space<vmem>>, %arg5: memref<1x64xf32, #tpu.memory_space<vmem>>, %arg6: memref<64x32xbf16, #tpu.memory_space<vmem>>, %arg7: memref<1x32xf32, #tpu.memory_space<vmem>>, %arg8: memref<16x32xf32, #tpu.memory_space<vmem>>) attributes {dimension_semantics = [#tpu.dimension_semantics<parallel>], iteration_bounds = array<i64: 1>, scalar_prefetch = 0 : i64, scratch_operands = 0 : i64, tpu.core_type = #tpu.core_type<tc>, window_params = [{transform_indices = @transform_0, window_bounds = array<i64: 16, 32>}, {pipeline_mode = #tpu.pipeline_mode<synchronous>, transform_indices = @transform_1, window_bounds = array<i64: 1, 32>}, {pipeline_mode = #tpu.pipeline_mode<synchronous>, transform_indices = @transform_2, window_bounds = array<i64: 1, 32>}, {pipeline_mode = #tpu.pipeline_mode<synchronous>, transform_indices = @transform_3, window_bounds = array<i64: 32, 64>}, {pipeline_mode = #tpu.pipeline_mode<synchronous>, transform_indices = @transform_4, window_bounds = array<i64: 1, 64>}, {pipeline_mode = #tpu.pipeline_mode<synchronous>, transform_indices = @transform_5, window_bounds = array<i64: 64, 32>}, {pipeline_mode = #tpu.pipeline_mode<synchronous>, transform_indices = @transform_6, window_bounds = array<i64: 1, 32>}, {transform_indices = @transform_7, window_bounds = array<i64: 16, 32>}]} {
    %c0 = arith.constant 0 : index
    %c0_0 = arith.constant 0 : index
    %0 = vector.load %arg1[%c0, %c0_0] : memref<16x32xf32, #tpu.memory_space<vmem>>, vector<16x32xf32>
    %c0_1 = arith.constant 0 : index
    %c0_2 = arith.constant 0 : index
    %1 = vector.load %arg2[%c0_1, %c0_2] : memref<1x32xf32, #tpu.memory_space<vmem>>, vector<1x32xf32>
    %c0_3 = arith.constant 0 : index
    %c0_4 = arith.constant 0 : index
    %2 = vector.load %arg3[%c0_3, %c0_4] : memref<1x32xf32, #tpu.memory_space<vmem>>, vector<1x32xf32>
    %cst = arith.constant dense<0.000000e+00> : vector<16xf32>
    %3 = vector.multi_reduction <add>, %0, %cst [1] : vector<16x32xf32> to vector<16xf32>
    %4 = vector.shape_cast %3 : vector<16xf32> to vector<16x1xf32>
    %cst_5 = arith.constant 3.200000e+01 : f32
    %5 = vector.broadcast %cst_5 : f32 to vector<16x1xf32>
    %6 = arith.divf %4, %5 : vector<16x1xf32>
    %7 = vector.broadcast %6 : vector<16x1xf32> to vector<16x32xf32>
    %8 = arith.subf %0, %7 : vector<16x32xf32>
    %9 = arith.mulf %8, %8 : vector<16x32xf32>
    %cst_6 = arith.constant dense<0.000000e+00> : vector<16xf32>
    %10 = vector.multi_reduction <add>, %9, %cst_6 [1] : vector<16x32xf32> to vector<16xf32>
    %11 = vector.shape_cast %10 : vector<16xf32> to vector<16x1xf32>
    %cst_7 = arith.constant 0.0322580636 : f32
    %12 = vector.broadcast %cst_7 : f32 to vector<16x1xf32>
    %13 = arith.mulf %11, %12 : vector<16x1xf32>
    %14 = math.sqrt %13 : vector<16x1xf32>
    %cst_8 = arith.constant 9.99999997E-7 : f32
    %15 = vector.broadcast %cst_8 : f32 to vector<16x1xf32>
    %16 = arith.addf %14, %15 : vector<16x1xf32>
    %17 = tpu.reciprocal %16 {approx = true} : vector<16x1xf32> -> vector<16x1xf32>
    %18 = vector.broadcast %1 : vector<1x32xf32> to vector<16x32xf32>
    %19 = arith.mulf %18, %8 : vector<16x32xf32>
    %20 = vector.broadcast %17 : vector<16x1xf32> to vector<16x32xf32>
    %21 = arith.mulf %19, %20 : vector<16x32xf32>
    %22 = vector.broadcast %2 : vector<1x32xf32> to vector<16x32xf32>
    %23 = arith.addf %21, %22 : vector<16x32xf32>
    %24 = arith.truncf %23 : vector<16x32xf32> to vector<16x32xbf16>
    %c0_9 = arith.constant 0 : index
    %c0_10 = arith.constant 0 : index
    %25 = vector.load %arg4[%c0_9, %c0_10] : memref<32x64xbf16, #tpu.memory_space<vmem>>, vector<32x64xbf16>
    %cst_11 = arith.constant dense<0.000000e+00> : vector<16x64xf32>
    %26 = tpu.matmul %24, %25, %cst_11 {dimension_numbers = #tpu.dot_dimension_numbers<[1], [0], [0], [1], [0, 0, 1, 1], [], []>} : vector<16x32xbf16>, vector<32x64xbf16>, vector<16x64xf32> -> vector<16x64xf32>
    %c0_12 = arith.constant 0 : index
    %c0_13 = arith.constant 0 : index
    %27 = vector.load %arg5[%c0_12, %c0_13] : memref<1x64xf32, #tpu.memory_space<vmem>>, vector<1x64xf32>
    %28 = vector.broadcast %27 : vector<1x64xf32> to vector<16x64xf32>
    %29 = arith.addf %26, %28 : vector<16x64xf32>
    %cst_14 = arith.constant 0.000000e+00 : f32
    %30 = vector.broadcast %cst_14 : f32 to vector<16x64xf32>
    %31 = arith.maximumf %29, %30 : vector<16x64xf32>
    %32 = arith.truncf %31 : vector<16x64xf32> to vector<16x64xbf16>
    %c0_15 = arith.constant 0 : index
    %c0_16 = arith.constant 0 : index
    %33 = vector.load %arg6[%c0_15, %c0_16] : memref<64x32xbf16, #tpu.memory_space<vmem>>, vector<64x32xbf16>
    %cst_17 = arith.constant dense<0.000000e+00> : vector<16x32xf32>
    %34 = tpu.matmul %32, %33, %cst_17 {dimension_numbers = #tpu.dot_dimension_numbers<[1], [0], [0], [1], [0, 0, 1, 1], [], []>} : vector<16x64xbf16>, vector<64x32xbf16>, vector<16x32xf32> -> vector<16x32xf32>
    %c0_18 = arith.constant 0 : index
    %c0_19 = arith.constant 0 : index
    %35 = vector.load %arg7[%c0_18, %c0_19] : memref<1x32xf32, #tpu.memory_space<vmem>>, vector<1x32xf32>
    %36 = vector.broadcast %35 : vector<1x32xf32> to vector<16x32xf32>
    %37 = arith.addf %34, %36 : vector<16x32xf32>
    %38 = arith.addf %0, %37 : vector<16x32xf32>
    %c0_20 = arith.constant 0 : index
    %c0_21 = arith.constant 0 : index
    %39 = vector.load %arg8[%c0_20, %c0_21] : memref<16x32xf32, #tpu.memory_space<vmem>>, vector<16x32xf32>
    tpu.vector_store %arg8[%c0_20, %c0_21], %38 {strides = array<i32>} : memref<16x32xf32, #tpu.memory_space<vmem>>, vector<16x32xf32>,
    return
  }
  func.func @transform_0(%arg0: i32) -> (i32, i32) {
    %c0_i32 = arith.constant 0 : i32
    %c0_i32_0 = arith.constant 0 : i32
    return %arg0, %c0_i32 : i32, i32
  }
  func.func @transform_1(%arg0: i32) -> (i32, i32) {
    %c0_i32 = arith.constant 0 : i32
    %c0_i32_0 = arith.constant 0 : i32
    %c0_i32_1 = arith.constant 0 : i32
    return %c0_i32, %c0_i32_0 : i32, i32
  }
  func.func @transform_2(%arg0: i32) -> (i32, i32) {
    %c0_i32 = arith.constant 0 : i32
    %c0_i32_0 = arith.constant 0 : i32
    %c0_i32_1 = arith.constant 0 : i32
    return %c0_i32, %c0_i32_0 : i32, i32
  }
  func.func @transform_3(%arg0: i32) -> (i32, i32) {
    %c0_i32 = arith.constant 0 : i32
    %c0_i32_0 = arith.constant 0 : i32
    %c0_i32_1 = arith.constant 0 : i32
    return %c0_i32, %c0_i32_0 : i32, i32
  }
  func.func @transform_4(%arg0: i32) -> (i32, i32) {
    %c0_i32 = arith.constant 0 : i32
    %c0_i32_0 = arith.constant 0 : i32
    %c0_i32_1 = arith.constant 0 : i32
    return %c0_i32, %c0_i32_0 : i32, i32
  }
  func.func @transform_5(%arg0: i32) -> (i32, i32) {
    %c0_i32 = arith.constant 0 : i32
    %c0_i32_0 = arith.constant 0 : i32
    %c0_i32_1 = arith.constant 0 : i32
    return %c0_i32, %c0_i32_0 : i32, i32
  }
  func.func @transform_6(%arg0: i32) -> (i32, i32) {
    %c0_i32 = arith.constant 0 : i32
    %c0_i32_0 = arith.constant 0 : i32
    %c0_i32_1 = arith.constant 0 : i32
    return %c0_i32, %c0_i32_0 : i32, i32
  }
  func.func @transform_7(%arg0: i32) -> (i32, i32) {
    %c0_i32 = arith.constant 0 : i32
    %c0_i32_0 = arith.constant 0 : i32
    return %arg0, %c0_i32 : i32, i32
  }
}

module attributes {stable_mosaic.version = 11 : i64} {
  func.func @_layernorm_kernel(%arg0: i32, %arg1: memref<16x32xf32, #tpu.memory_space<vmem>>, %arg2: memref<1x32xf32, #tpu.memory_space<vmem>>, %arg3: memref<1x32xf32, #tpu.memory_space<vmem>>, %arg4: memref<16x32xf32, #tpu.memory_space<vmem>>) attributes {dimension_semantics = [#tpu.dimension_semantics<parallel>], iteration_bounds = array<i64: 1>, scalar_prefetch = 0 : i64, scratch_operands = 0 : i64, tpu.core_type = #tpu.core_type<tc>, window_params = [{transform_indices = @transform_0, window_bounds = array<i64: 16, 32>}, {pipeline_mode = #tpu.pipeline_mode<synchronous>, transform_indices = @transform_1, window_bounds = array<i64: 1, 32>}, {pipeline_mode = #tpu.pipeline_mode<synchronous>, transform_indices = @transform_2, window_bounds = array<i64: 1, 32>}, {transform_indices = @transform_3, window_bounds = array<i64: 16, 32>}]} {
    %c0 = arith.constant 0 : index
    %c0_0 = arith.constant 0 : index
    %0 = vector.load %arg1[%c0, %c0_0] : memref<16x32xf32, #tpu.memory_space<vmem>>, vector<16x32xf32>
    %c0_1 = arith.constant 0 : index
    %c0_2 = arith.constant 0 : index
    %1 = vector.load %arg2[%c0_1, %c0_2] : memref<1x32xf32, #tpu.memory_space<vmem>>, vector<1x32xf32>
    %c0_3 = arith.constant 0 : index
    %c0_4 = arith.constant 0 : index
    %2 = vector.load %arg3[%c0_3, %c0_4] : memref<1x32xf32, #tpu.memory_space<vmem>>, vector<1x32xf32>
    %cst = arith.constant dense<0.000000e+00> : vector<16xf32>
    %3 = vector.multi_reduction <add>, %0, %cst [1] : vector<16x32xf32> to vector<16xf32>
    %4 = vector.shape_cast %3 : vector<16xf32> to vector<16x1xf32>
    %cst_5 = arith.constant 3.200000e+01 : f32
    %5 = vector.broadcast %cst_5 : f32 to vector<16x1xf32>
    %6 = arith.divf %4, %5 : vector<16x1xf32>
    %7 = vector.broadcast %6 : vector<16x1xf32> to vector<16x32xf32>
    %8 = arith.subf %0, %7 : vector<16x32xf32>
    %9 = arith.mulf %8, %8 : vector<16x32xf32>
    %cst_6 = arith.constant dense<0.000000e+00> : vector<16xf32>
    %10 = vector.multi_reduction <add>, %9, %cst_6 [1] : vector<16x32xf32> to vector<16xf32>
    %11 = vector.shape_cast %10 : vector<16xf32> to vector<16x1xf32>
    %cst_7 = arith.constant 0.0322580636 : f32
    %12 = vector.broadcast %cst_7 : f32 to vector<16x1xf32>
    %13 = arith.mulf %11, %12 : vector<16x1xf32>
    %14 = math.sqrt %13 : vector<16x1xf32>
    %cst_8 = arith.constant 9.99999997E-7 : f32
    %15 = vector.broadcast %cst_8 : f32 to vector<16x1xf32>
    %16 = arith.addf %14, %15 : vector<16x1xf32>
    %17 = tpu.reciprocal %16 {approx = true} : vector<16x1xf32> -> vector<16x1xf32>
    %18 = vector.broadcast %1 : vector<1x32xf32> to vector<16x32xf32>
    %19 = arith.mulf %18, %8 : vector<16x32xf32>
    %20 = vector.broadcast %17 : vector<16x1xf32> to vector<16x32xf32>
    %21 = arith.mulf %19, %20 : vector<16x32xf32>
    %22 = vector.broadcast %2 : vector<1x32xf32> to vector<16x32xf32>
    %23 = arith.addf %21, %22 : vector<16x32xf32>
    %c0_9 = arith.constant 0 : index
    %c0_10 = arith.constant 0 : index
    %24 = vector.load %arg4[%c0_9, %c0_10] : memref<16x32xf32, #tpu.memory_space<vmem>>, vector<16x32xf32>
    tpu.vector_store %arg4[%c0_9, %c0_10], %23 {strides = array<i32>} : memref<16x32xf32, #tpu.memory_space<vmem>>, vector<16x32xf32>,
    return
  }
  func.func @transform_0(%arg0: i32) -> (i32, i32) {
    %c0_i32 = arith.constant 0 : i32
    %c0_i32_0 = arith.constant 0 : i32
    return %arg0, %c0_i32 : i32, i32
  }
  func.func @transform_1(%arg0: i32) -> (i32, i32) {
    %c0_i32 = arith.constant 0 : i32
    %c0_i32_0 = arith.constant 0 : i32
    %c0_i32_1 = arith.constant 0 : i32
    return %c0_i32, %c0_i32_0 : i32, i32
  }
  func.func @transform_2(%arg0: i32) -> (i32, i32) {
    %c0_i32 = arith.constant 0 : i32
    %c0_i32_0 = arith.constant 0 : i32
    %c0_i32_1 = arith.constant 0 : i32
    return %c0_i32, %c0_i32_0 : i32, i32
  }
  func.func @transform_3(%arg0: i32) -> (i32, i32) {
    %c0_i32 = arith.constant 0 : i32
    %c0_i32_0 = arith.constant 0 : i32
    return %arg0, %c0_i32 : i32, i32
  }
}

</mosaic_0001>

<llo_original>
// kernel: encoder_forward.6
$region0: #{encoder_forward.6}
  #allocation0 [shape = 'u32[]', space=smem, size = 0x4, offset = 0x4, fixed_abs, tag = 'smem constant byte address 0x4 - core index']
  #allocation1 [shape = 'u32[72,128]{1,0:T(1,128)}', space=vmem, size = 0x9000, scoped, tag = 'internal scratch']
  %s0 = inlined_call_operand.vmem [shape: f32[16,32], index: 0, kind: input, shape index: {}]
  %s1 = inlined_call_operand.vmem [shape: f32[1,32], index: 1, kind: input, shape index: {}]
  %s2 = inlined_call_operand.vmem [shape: f32[1,32], index: 2, kind: input, shape index: {}]
  %s3 = inlined_call_operand.vmem [shape: bf16[32,64], index: 3, kind: input, shape index: {}]
  %s4 = inlined_call_operand.vmem [shape: f32[1,64], index: 4, kind: input, shape index: {}]
  %s5 = inlined_call_operand.vmem [shape: bf16[64,32], index: 5, kind: input, shape index: {}]
  %s6 = inlined_call_operand.vmem [shape: f32[1,32], index: 6, kind: input, shape index: {}]
  %s7 = inlined_call_operand.vmem [shape: f32[16,32], index: 7, kind: output, shape index: {}]
  %s8 = sld [smem:[#allocation0]]
  $region38: #{encoder_forward.6} parent=0
    _
  %s10 = ssub.s32 1, %s8
  %s11 = scalar_select 0, %s10, %s8
  // Predicated region
  $region2: #{encoder_forward.6} parent=0 // pred_check
    _
  $region3: #{encoder_forward.6} parent=0 // pred_check_branch
    %13 = sbr.rel (0) target = $region5
  $region4: #{encoder_forward.6} parent=0 // pred_region
    _
  $region5: #{encoder_forward.6} parent=0 // pred_fallthru
    _
  // Predicated region
  $region6: #{encoder_forward.6} parent=0 // pred_check
    _
  $region7: #{encoder_forward.6} parent=0 // pred_check_branch
    %15 = sbr.rel (0) target = $region9
  $region8: #{encoder_forward.6} parent=0 // pred_region
    _
  $region9: #{encoder_forward.6} parent=0 // pred_fallthru
    _
  // Predicated region
  $region10: #{encoder_forward.6} parent=0 // pred_check
    _
  $region11: #{encoder_forward.6} parent=0 // pred_check_branch
    %17 = sbr.rel (0) target = $region13
  $region12: #{encoder_forward.6} parent=0 // pred_region
    _
  $region13: #{encoder_forward.6} parent=0 // pred_fallthru
    _
  // Predicated region
  $region14: #{encoder_forward.6} parent=0 // pred_check
    _
  $region15: #{encoder_forward.6} parent=0 // pred_check_branch
    %19 = sbr.rel (0) target = $region17
  $region16: #{encoder_forward.6} parent=0 // pred_region
    _
  $region17: #{encoder_forward.6} parent=0 // pred_fallthru
    _
  // Predicated region
  $region18: #{encoder_forward.6} parent=0 // pred_check
    _
  $region19: #{encoder_forward.6} parent=0 // pred_check_branch
    %21 = sbr.rel (0) target = $region21
  $region20: #{encoder_forward.6} parent=0 // pred_region
    _
  $region21: #{encoder_forward.6} parent=0 // pred_fallthru
    _
  // Predicated region
  $region22: #{encoder_forward.6} parent=0 // pred_check
    _
  $region23: #{encoder_forward.6} parent=0 // pred_check_branch
    %23 = sbr.rel (0) target = $region25
  $region24: #{encoder_forward.6} parent=0 // pred_region
    _
  $region25: #{encoder_forward.6} parent=0 // pred_fallthru
    _
  // Predicated region
  $region26: #{encoder_forward.6} parent=0 // pred_check
    _
  $region27: #{encoder_forward.6} parent=0 // pred_check_branch
    %25 = sbr.rel (0) target = $region29
  $region28: #{encoder_forward.6} parent=0 // pred_region
    _
  $region29: #{encoder_forward.6} parent=0 // pred_fallthru
    _
  %v27 = vld [vmem:[%s0] sm:$0xff]
  %v28 = vld [vmem:[%s0 + $0x8] sm:$0xff]
  %v29 = vld [vmem:[%s1] sm:$0x1]
  %v30 = vld [vmem:[%s2] sm:$0x1]
  %vm31 = vcmask 261120
  %v32 = vsel %vm31, %v27, 0.0
  %33 = vadd.xlane.f32.xlu0 %v32
  %v34 = vpop.xlane.xlu0 %33
  %v35 = vsel %vm31, %v28, 0.0
  %36 = vadd.xlane.f32.xlu0 %v35
  %v37 = vpop.xlane.xlu0 %36
  %v38 = vrcp.pop 32.0
  %v39 = vmul.f32 32.0, %v38
  %v40 = vsub.f32 1.0, %v39
  %v41 = vmul.f32 %v38, %v40
  %v42 = vadd.f32 %v38, %v41
  %vm43 = vweird.f32 %v38
  %v44 = vsel %vm43, %v38, %v42
  %v45 = vmul.f32 %v34, %v44
  %v46 = vmul.f32 %v37, %v44
  %v47 = vsub.f32 %v27, %v45
  %v48 = vsub.f32 %v28, %v46
  %v49 = vmul.f32 %v47, %v47
  %v50 = vmul.f32 %v48, %v48
  %v51 = vsel %vm31, %v49, 0.0
  %52 = vadd.xlane.f32.xlu0 %v51
  %v53 = vpop.xlane.xlu0 %52
  %v54 = vsel %vm31, %v50, 0.0
  %55 = vadd.xlane.f32.xlu0 %v54
  %v56 = vpop.xlane.xlu0 %55
  %v57 = vmul.f32 %v53, 0.032258064
  %v58 = vmul.f32 %v56, 0.032258064
  %v59 = vrsqrt.pop %v57
  %v60 = vmul.f32 %v59, %v57
  %v61 = vmul.f32 %v60, %v59
  %v62 = vmul.f32 0.5, %v61
  %v63 = vsub.f32 1.5, %v62
  %v64 = vmul.f32 %v59, %v63
  %v65 = vmul.f32 %v57, %v64
  %vm66 = vcmp.eq.f32.partialorder %v57, inf
  %v67 = vsel %vm66, %v57, %v65
  %vm68 = vcmp.eq.f32.partialorder %v57, 0.0
  %v69 = vand.u32 %v57, 2147483648
  %v70 = vsel %vm68, %v69, %v67
  %v71 = vrsqrt.pop %v58
  %v72 = vmul.f32 %v71, %v58
  %v73 = vmul.f32 %v72, %v71
  %v74 = vmul.f32 0.5, %v73
  %v75 = vsub.f32 1.5, %v74
  %v76 = vmul.f32 %v71, %v75
  %v77 = vmul.f32 %v58, %v76
  %vm78 = vcmp.eq.f32.partialorder %v58, inf
  %v79 = vsel %vm78, %v58, %v77
  %vm80 = vcmp.eq.f32.partialorder %v58, 0.0
  %v81 = vand.u32 %v58, 2147483648
  %v82 = vsel %vm80, %v81, %v79
  %v83 = vadd.f32 %v70, 1e-06
  %v84 = vadd.f32 %v82, 1e-06
  %v85 = vrcp.pop %v83
  %v86 = vrcp.pop %v84
  %v88 = vperm.slane %v29, 0
  %v90 = vmul.f32 %v88, %v47
  %v91 = vmul.f32 %v88, %v48
  %v92 = vmul.f32 %v90, %v85
  %v93 = vmul.f32 %v91, %v86
  %v95 = vperm.slane %v30, 0
  %v97 = vadd.f32 %v92, %v95
  %v98 = vadd.f32 %v93, %v95
  %v99 = vpack.c.bf16 %v98, %v97
  %v100 = vld [vmem:[%s3] sm:$0xf]
  %v101 = vld [vmem:[%s3 + $0x4] sm:$0xf]
  %v102 = vld [vmem:[%s3 + $0x8] sm:$0xf]
  %v103 = vld [vmem:[%s3 + $0xc] sm:$0xf]
  %v104 = vld [vmem:[%s4] sm:$0x1]
  %v106 = vperm.slane %v104, 0
  %v112 = vunpack.c.l.b16 %v100
  %v113 = vunpack.c.l.b16 %v101
  %v114 = vunpack.c.l.b16 %v102
  %v115 = vunpack.c.l.b16 %v103
  %v116 = vpack.c.b16 %v113, %v112
  %v117 = vpack.c.b16 %v115, %v114
  %v121 = vsel %vm31, %v99, 0
  %123 = vmatpush.bf16.msra.mxu0 0
  %124 = vmatpush.bf16.msra.mxu0 0
  %125 = vmatpush.bf16.msra.mxu0 0
  %126 = vmatpush.bf16.msra.mxu0 0
  %127 = vmatpush.bf16.msra.mxu0 0
  %128 = vmatpush.bf16.msra.mxu0 0
  %129 = vmatpush.bf16.msra.mxu0 %v117
  %130 = vmatpush.bf16.msra.mxu0 %v116
  %131 = vmatmul.bf16.gmra.mxu0 %v121
  %v132 = vpop.f32.mrf.mxu0
  %v133 = vadd.f32 %v106, %v132
  %v134 = vpop.f32.mrf.mxu0
  %v135 = vadd.f32 %v106, %v134
  %136 = vdwg.mxu0
  %v137 = vmax.f32 %v133, 0.0
  %v138 = vmax.f32 %v135, 0.0
  %v139 = vpack.c.bf16 %v138, %v137
  %v140 = vld [vmem:[%s5] sm:$0xf]
  %v141 = vld [vmem:[%s5 + $0x4] sm:$0xf]
  %v142 = vld [vmem:[%s5 + $0x8] sm:$0xf]
  %v143 = vld [vmem:[%s5 + $0xc] sm:$0xf]
  %v144 = vld [vmem:[%s5 + $0x10] sm:$0xf]
  %v145 = vld [vmem:[%s5 + $0x14] sm:$0xf]
  %v146 = vld [vmem:[%s5 + $0x18] sm:$0xf]
  %v147 = vld [vmem:[%s5 + $0x1c] sm:$0xf]
  %v148 = vld [vmem:[%s6] sm:$0x1]
  %v150 = vperm.slane %v148, 0
  %v160 = vunpack.c.l.b16 %v140
  %v161 = vunpack.c.l.b16 %v141
  %v162 = vunpack.c.l.b16 %v142
  %v163 = vunpack.c.l.b16 %v143
  %v164 = vunpack.c.l.b16 %v144
  %v165 = vunpack.c.l.b16 %v145
  %v166 = vunpack.c.l.b16 %v146
  %v167 = vunpack.c.l.b16 %v147
  %v168 = vpack.c.b16 %v161, %v160
  %v169 = vpack.c.b16 %v163, %v162
  %v170 = vpack.c.b16 %v165, %v164
  %v171 = vpack.c.b16 %v167, %v166
  %vm176 = vcmask 523264
  %v178 = vsel %vm176, %v139, 0
  %180 = vmatpush.bf16.msra.mxu0 0
  %181 = vmatpush.bf16.msra.mxu0 0
  %182 = vmatpush.bf16.msra.mxu0 0
  %183 = vmatpush.bf16.msra.mxu0 0
  %184 = vmatpush.bf16.msra.mxu0 %v171
  %185 = vmatpush.bf16.msra.mxu0 %v170
  %186 = vmatpush.bf16.msra.mxu0 %v169
  %187 = vmatpush.bf16.msra.mxu0 %v168
  %188 = vmatmul.bf16.gmra.mxu0 %v178
  %v189 = vpop.f32.mrf.mxu0
  %v190 = vadd.f32 %v150, %v189
  %v191 = vpop.f32.mrf.mxu0
  %v192 = vadd.f32 %v150, %v191
  %193 = vdwg.mxu0
  %v194 = vadd.f32 %v27, %v190
  %v195 = vadd.f32 %v28, %v192
  %196 = vst.msk [vmem:[%s7] sm:$0xff] %vm31, %v194
  %197 = vst.msk [vmem:[%s7 + $0x8] sm:$0xff] %vm31, %v195
  // Predicated region
  $region30: #{encoder_forward.6} parent=0 // pred_check
    _
  $region31: #{encoder_forward.6} parent=0 // pred_check_branch
    %199 = sbr.rel (0) target = $region33
  $region32: #{encoder_forward.6} parent=0 // pred_region
    _
  $region33: #{encoder_forward.6} parent=0 // pred_fallthru
    _
  // Predicated region
  $region34: #{encoder_forward.6} parent=0 // pred_check
    _
  $region35: #{encoder_forward.6} parent=0 // pred_check_branch
    %201 = sbr.rel (0) target = $region37
  $region36: #{encoder_forward.6} parent=0 // pred_region
    _
  $region37: #{encoder_forward.6} parent=0 // pred_fallthru
    _

// kernel: encoder_forward.9
$region0: #{encoder_forward.9}
  #allocation0 [shape = 'u32[]', space=smem, size = 0x4, offset = 0x4, fixed_abs, tag = 'smem constant byte address 0x4 - core index']
  #allocation1 [shape = 'u32[72,128]{1,0:T(1,128)}', space=vmem, size = 0x9000, scoped, tag = 'internal scratch']
  %s0 = inlined_call_operand.vmem [shape: f32[16,32], index: 0, kind: input, shape index: {}]
  %s1 = inlined_call_operand.vmem [shape: f32[1,32], index: 1, kind: input, shape index: {}]
  %s2 = inlined_call_operand.vmem [shape: f32[1,32], index: 2, kind: input, shape index: {}]
  %s3 = inlined_call_operand.hbm [shape: f32[16,32], index: 3, kind: output, shape index: {}]
  %s4 = sld [smem:[#allocation0]]
  $region22: #{encoder_forward.9} parent=0
    _
  %s6 = ssub.s32 1, %s4
  %s7 = scalar_select 0, %s6, %s4
  $region1: #{encoder_forward.9} parent=0
    #allocation2 [shape = 'u8[8192]{0}', space=vmem, size = 0x2000, scoped, tag = 'output window, operand 0, single buffered']
    #allocation3 [shape = 's32[1]{0}', space=sflag, size = 0x4, scoped, tag = 'scoped memory for encoder_forward.9']
    %8 = vsyncpa [#allocation3], 0
    // Predicated region
    $region2: #{encoder_forward.9} parent=1 // pred_check
      _
    $region3: #{encoder_forward.9} parent=1 // pred_check_branch
      %10 = sbr.rel (0) target = $region5
    $region4: #{encoder_forward.9} parent=1 // pred_region
      _
    $region5: #{encoder_forward.9} parent=1 // pred_fallthru
      _
    // Predicated region
    $region6: #{encoder_forward.9} parent=1 // pred_check
      _
    $region7: #{encoder_forward.9} parent=1 // pred_check_branch
      %12 = sbr.rel (0) target = $region9
    $region8: #{encoder_forward.9} parent=1 // pred_region
      _
    $region9: #{encoder_forward.9} parent=1 // pred_fallthru
      _
    // Predicated region
    $region10: #{encoder_forward.9} parent=1 // pred_check
      _
    $region11: #{encoder_forward.9} parent=1 // pred_check_branch
      %14 = sbr.rel (0) target = $region13
    $region12: #{encoder_forward.9} parent=1 // pred_region
      _
    $region13: #{encoder_forward.9} parent=1 // pred_fallthru
      _
    %v15 = vld [vmem:[%s0] sm:$0xff]
    %v16 = vld [vmem:[%s0 + $0x8] sm:$0xff]
    %v17 = vld [vmem:[%s1] sm:$0x1]
    %v18 = vld [vmem:[%s2] sm:$0x1]
    %vm19 = vcmask 261120
    %v20 = vsel %vm19, %v15, 0.0
    %21 = vadd.xlane.f32.xlu0 %v20
    %v22 = vpop.xlane.xlu0 %21
    %v23 = vsel %vm19, %v16, 0.0
    %24 = vadd.xlane.f32.xlu0 %v23
    %v25 = vpop.xlane.xlu0 %24
    %v26 = vrcp.pop 32.0
    %v27 = vmul.f32 32.0, %v26
    %v28 = vsub.f32 1.0, %v27
    %v29 = vmul.f32 %v26, %v28
    %v30 = vadd.f32 %v26, %v29
    %vm31 = vweird.f32 %v26
    %v32 = vsel %vm31, %v26, %v30
    %v33 = vmul.f32 %v22, %v32
    %v34 = vmul.f32 %v25, %v32
    %v35 = vsub.f32 %v15, %v33
    %v36 = vsub.f32 %v16, %v34
    %v37 = vmul.f32 %v35, %v35
    %v38 = vmul.f32 %v36, %v36
    %v39 = vsel %vm19, %v37, 0.0
    %40 = vadd.xlane.f32.xlu0 %v39
    %v41 = vpop.xlane.xlu0 %40
    %v42 = vsel %vm19, %v38, 0.0
    %43 = vadd.xlane.f32.xlu0 %v42
    %v44 = vpop.xlane.xlu0 %43
    %v45 = vmul.f32 %v41, 0.032258064
    %v46 = vmul.f32 %v44, 0.032258064
    %v47 = vrsqrt.pop %v45
    %v48 = vmul.f32 %v47, %v45
    %v49 = vmul.f32 %v48, %v47
    %v50 = vmul.f32 0.5, %v49
    %v51 = vsub.f32 1.5, %v50
    %v52 = vmul.f32 %v47, %v51
    %v53 = vmul.f32 %v45, %v52
    %vm54 = vcmp.eq.f32.partialorder %v45, inf
    %v55 = vsel %vm54, %v45, %v53
    %vm56 = vcmp.eq.f32.partialorder %v45, 0.0
    %v57 = vand.u32 %v45, 2147483648
    %v58 = vsel %vm56, %v57, %v55
    %v59 = vrsqrt.pop %v46
    %v60 = vmul.f32 %v59, %v46
    %v61 = vmul.f32 %v60, %v59
    %v62 = vmul.f32 0.5, %v61
    %v63 = vsub.f32 1.5, %v62
    %v64 = vmul.f32 %v59, %v63
    %v65 = vmul.f32 %v46, %v64
    %vm66 = vcmp.eq.f32.partialorder %v46, inf
    %v67 = vsel %vm66, %v46, %v65
    %vm68 = vcmp.eq.f32.partialorder %v46, 0.0
    %v69 = vand.u32 %v46, 2147483648
    %v70 = vsel %vm68, %v69, %v67
    %v71 = vadd.f32 %v58, 1e-06
    %v72 = vadd.f32 %v70, 1e-06
    %v73 = vrcp.pop %v71
    %v74 = vrcp.pop %v72
    %v76 = vperm.slane %v17, 0
    %v78 = vmul.f32 %v76, %v35
    %v79 = vmul.f32 %v76, %v36
    %v80 = vmul.f32 %v78, %v73
    %v81 = vmul.f32 %v79, %v74
    %v83 = vperm.slane %v18, 0
    %v85 = vadd.f32 %v80, %v83
    %v86 = vadd.f32 %v81, %v83
    %87 = vst.msk [vmem:[#allocation2] sm:$0xff] %vm19, %v85
    %88 = vst.msk [vmem:[#allocation2 + $0x8] sm:$0xff] %vm19, %v86
    // Predicated region
    $region14: #{encoder_forward.9} parent=1 // pred_check
      _
    $region15: #{encoder_forward.9} parent=1 // pred_check_branch
      %90 = sbr.rel (0) target = $region17
    $region16: #{encoder_forward.9} parent=1 // pred_region
      %92 = vsyncadd [#allocation3], 0
      %s93 = sshll.u32 [#allocation2], 4
      %s94 = int_to_ptr.vmem [resolvable:$true] %s93
      %s95 = sshll.u32 %s3, 4
      %s96 = int_to_ptr.hbm [resolvable:$true] %s95
      %101 = dma.vmem_to_hbm [thread:$0]  %s94, 256, %s96, [#allocation3], 128, 128, 8
    $region17: #{encoder_forward.9} parent=1 // pred_fallthru
      _
    // Predicated region
    $region18: #{encoder_forward.9} parent=1 // pred_check
      _
    $region19: #{encoder_forward.9} parent=1 // pred_check_branch
      %103 = sbr.rel (0) target = $region21
    $region20: #{encoder_forward.9} parent=1 // pred_region
      %105 = dma.done [#allocation3], 256
    $region21: #{encoder_forward.9} parent=1 // pred_fallthru
      _
    %106 = vsyncpa [#allocation3], 1

// kernel: encoder_forward.5
$region0: #{encoder_forward.5}
  #allocation0 [shape = 'u32[]', space=smem, size = 0x4, offset = 0x4, fixed_abs, tag = 'smem constant byte address 0x4 - core index']
  #allocation1 [shape = 'u32[72,128]{1,0:T(1,128)}', space=vmem, size = 0x9000, scoped, tag = 'internal scratch']
  %s0 = inlined_call_operand.vmem [shape: f32[2,8,32], index: 0, kind: input, shape index: {}]
  %s1 = inlined_call_operand.vmem [shape: f32[2,1,8], index: 1, kind: input, shape index: {}]
  %s2 = inlined_call_operand.vmem [shape: f32[1,32], index: 2, kind: input, shape index: {}]
  %s3 = inlined_call_operand.vmem [shape: f32[1,32], index: 3, kind: input, shape index: {}]
  %s4 = inlined_call_operand.vmem [shape: bf16[32,96], index: 4, kind: input, shape index: {}]
  %s5 = inlined_call_operand.vmem [shape: f32[1,96], index: 5, kind: input, shape index: {}]
  %s6 = inlined_call_operand.vmem [shape: bf16[32,32], index: 6, kind: input, shape index: {}]
  %s7 = inlined_call_operand.vmem [shape: f32[1,32], index: 7, kind: input, shape index: {}]
  %s8 = inlined_call_operand.vmem [shape: f32[2,8,32], index: 8, kind: output, shape index: {}]
  %s9 = sld [smem:[#allocation0]]
  $region65: #{encoder_forward.5} parent=0
    _
  %s11 = ssub.s32 1, %s9
  %s12 = scalar_select 0, %s11, %s9
  loop: start=0, step=1, limit=4
  $region2: #{encoder_forward.5} parent=0 // loop_pre_header
    _
  $region3: #{encoder_forward.5} parent=0 // loop_header
    %s14 = sphi 0, %s18
    %p15 = scmp.ge.s32.totalorder %s14, 4
    %s24 = sphi 0, %s26
    %s27 = sphi 0, %s24
    %s28 = sphi 0, %s27
    %s44 = sphi 0, %s28
    %s50 = sphi 0, %s52
    %s53 = sphi 0, %s50
    %s54 = sphi 0, %s53
    %s70 = sphi 0, %s54
    %s74 = sphi 0, %s74
    %s76 = sphi 0, %s74
    %s77 = sphi 0, %s76
    %s91 = sphi 0, %s77
    %s95 = sphi 0, %s95
    %s97 = sphi 0, %s95
    %s98 = sphi 0, %s97
    %s112 = sphi 0, %s98
    %s116 = sphi 0, %s116
    %s118 = sphi 0, %s116
    %s119 = sphi 0, %s118
    %s133 = sphi 0, %s119
    %s137 = sphi 0, %s137
    %s139 = sphi 0, %s137
    %s140 = sphi 0, %s139
    %s154 = sphi 0, %s140
    %s158 = sphi 0, %s158
    %s160 = sphi 0, %s158
    %s161 = sphi 0, %s160
    %s175 = sphi 0, %s161
    %s179 = sphi 0, %s179
    %s181 = sphi 0, %s179
    %s182 = sphi 0, %s181
    %s196 = sphi 0, %s182
    %s202 = sphi 0, %s204
    %s205 = sphi 0, %s202
    %s206 = sphi 0, %s205
    %s222 = sphi 0, %s206
  $region4: #{encoder_forward.5} parent=0 // loop_header_branch
    %17 = sbr.rel (%p15) target = $region8
  $region5: #{encoder_forward.5} parent=0 // loop_body
    %s19 = ssub.s32 %s14, 1
    %s20 = ssub.s32 %s14, 2
    %s21 = sadd.s32 %s14, 1
    %s22 = ssub.s32 %s14, %s21
    %p23 = scmp.eq.s32.totalorder %s22, 0
    %s25 = sadd.s32 %s24, 1
    %s26 = scalar_select %p23, %s24, %s25
    %p29 = pneg %p23
    %p30 = scmp.eq.s32.totalorder %s14, 1
    %p31 = por %p29, %p30
    %p32 = scmp.ne.s32.totalorder %s24, %s27
    %p33 = scmp.eq.s32.totalorder %s14, 0
    %p34 = por %p32, %p33
    %p35 = scmp.ne.s32.totalorder %s24, %s27
    %p36 = scmp.eq.s32.totalorder %s19, 1
    %p37 = por %p35, %p36
    %p38 = scmp.ne.s32.totalorder %s27, %s28
    %p39 = scmp.eq.s32.totalorder %s19, 0
    %p40 = por %p38, %p39
    %p41 = scmp.ne.s32.totalorder %s27, %s28
    %p42 = scmp.eq.s32.totalorder %s20, 1
    %p43 = por %p41, %p42
    %p45 = scmp.ne.s32.totalorder %s28, %s44
    %p46 = scmp.eq.s32.totalorder %s20, 0
    %p47 = por %p45, %p46
    %s48 = ssub.s32 %s14, %s21
    %p49 = scmp.eq.s32.totalorder %s48, 0
    %s51 = sadd.s32 %s50, 1
    %s52 = scalar_select %p49, %s50, %s51
    %p55 = pneg %p49
    %p56 = scmp.eq.s32.totalorder %s14, 1
    %p57 = por %p55, %p56
    %p58 = scmp.ne.s32.totalorder %s50, %s53
    %p59 = scmp.eq.s32.totalorder %s14, 0
    %p60 = por %p58, %p59
    %p61 = scmp.ne.s32.totalorder %s50, %s53
    %p62 = scmp.eq.s32.totalorder %s19, 1
    %p63 = por %p61, %p62
    %p64 = scmp.ne.s32.totalorder %s53, %s54
    %p65 = scmp.eq.s32.totalorder %s19, 0
    %p66 = por %p64, %p65
    %p67 = scmp.ne.s32.totalorder %s53, %s54
    %p68 = scmp.eq.s32.totalorder %s20, 1
    %p69 = por %p67, %p68
    %p71 = scmp.ne.s32.totalorder %s54, %s70
    %p72 = scmp.eq.s32.totalorder %s20, 0
    %p73 = por %p71, %p72
    %s75 = sadd.s32 %s74, 1
    %p78 = scmp.eq.s32.totalorder %s14, 1
    %p79 = scmp.ne.s32.totalorder %s74, %s76
    %p80 = scmp.eq.s32.totalorder %s14, 0
    %p81 = por %p79, %p80
    %p82 = scmp.ne.s32.totalorder %s74, %s76
    %p83 = scmp.eq.s32.totalorder %s19, 1
    %p84 = por %p82, %p83
    %p85 = scmp.ne.s32.totalorder %s76, %s77
    %p86 = scmp.eq.s32.totalorder %s19, 0
    %p87 = por %p85, %p86
    %p88 = scmp.ne.s32.totalorder %s76, %s77
    %p89 = scmp.eq.s32.totalorder %s20, 1
    %p90 = por %p88, %p89
    %p92 = scmp.ne.s32.totalorder %s77, %s91
    %p93 = scmp.eq.s32.totalorder %s20, 0
    %p94 = por %p92, %p93
    %s96 = sadd.s32 %s95, 1
    %p99 = scmp.eq.s32.totalorder %s14, 1
    %p100 = scmp.ne.s32.totalorder %s95, %s97
    %p101 = scmp.eq.s32.totalorder %s14, 0
    %p102 = por %p100, %p101
    %p103 = scmp.ne.s32.totalorder %s95, %s97
    %p104 = scmp.eq.s32.totalorder %s19, 1
    %p105 = por %p103, %p104
    %p106 = scmp.ne.s32.totalorder %s97, %s98
    %p107 = scmp.eq.s32.totalorder %s19, 0
    %p108 = por %p106, %p107
    %p109 = scmp.ne.s32.totalorder %s97, %s98
    %p110 = scmp.eq.s32.totalorder %s20, 1
    %p111 = por %p109, %p110
    %p113 = scmp.ne.s32.totalorder %s98, %s112
    %p114 = scmp.eq.s32.totalorder %s20, 0
    %p115 = por %p113, %p114
    %s117 = sadd.s32 %s116, 1
    %p120 = scmp.eq.s32.totalorder %s14, 1
    %p121 = scmp.ne.s32.totalorder %s116, %s118
    %p122 = scmp.eq.s32.totalorder %s14, 0
    %p123 = por %p121, %p122
    %p124 = scmp.ne.s32.totalorder %s116, %s118
    %p125 = scmp.eq.s32.totalorder %s19, 1
    %p126 = por %p124, %p125
    %p127 = scmp.ne.s32.totalorder %s118, %s119
    %p128 = scmp.eq.s32.totalorder %s19, 0
    %p129 = por %p127, %p128
    %p130 = scmp.ne.s32.totalorder %s118, %s119
    %p131 = scmp.eq.s32.totalorder %s20, 1
    %p132 = por %p130, %p131
    %p134 = scmp.ne.s32.totalorder %s119, %s133
    %p135 = scmp.eq.s32.totalorder %s20, 0
    %p136 = por %p134, %p135
    %s138 = sadd.s32 %s137, 1
    %p141 = scmp.eq.s32.totalorder %s14, 1
    %p142 = scmp.ne.s32.totalorder %s137, %s139
    %p143 = scmp.eq.s32.totalorder %s14, 0
    %p144 = por %p142, %p143
    %p145 = scmp.ne.s32.totalorder %s137, %s139
    %p146 = scmp.eq.s32.totalorder %s19, 1
    %p147 = por %p145, %p146
    %p148 = scmp.ne.s32.totalorder %s139, %s140
    %p149 = scmp.eq.s32.totalorder %s19, 0
    %p150 = por %p148, %p149
    %p151 = scmp.ne.s32.totalorder %s139, %s140
    %p152 = scmp.eq.s32.totalorder %s20, 1
    %p153 = por %p151, %p152
    %p155 = scmp.ne.s32.totalorder %s140, %s154
    %p156 = scmp.eq.s32.totalorder %s20, 0
    %p157 = por %p155, %p156
    %s159 = sadd.s32 %s158, 1
    %p162 = scmp.eq.s32.totalorder %s14, 1
    %p163 = scmp.ne.s32.totalorder %s158, %s160
    %p164 = scmp.eq.s32.totalorder %s14, 0
    %p165 = por %p163, %p164
    %p166 = scmp.ne.s32.totalorder %s158, %s160
    %p167 = scmp.eq.s32.totalorder %s19, 1
    %p168 = por %p166, %p167
    %p169 = scmp.ne.s32.totalorder %s160, %s161
    %p170 = scmp.eq.s32.totalorder %s19, 0
    %p171 = por %p169, %p170
    %p172 = scmp.ne.s32.totalorder %s160, %s161
    %p173 = scmp.eq.s32.totalorder %s20, 1
    %p174 = por %p172, %p173
    %p176 = scmp.ne.s32.totalorder %s161, %s175
    %p177 = scmp.eq.s32.totalorder %s20, 0
    %p178 = por %p176, %p177
    %s180 = sadd.s32 %s179, 1
    %p183 = scmp.eq.s32.totalorder %s14, 1
    %p184 = scmp.ne.s32.totalorder %s179, %s181
    %p185 = scmp.eq.s32.totalorder %s14, 0
    %p186 = por %p184, %p185
    %p187 = scmp.ne.s32.totalorder %s179, %s181
    %p188 = scmp.eq.s32.totalorder %s19, 1
    %p189 = por %p187, %p188
    %p190 = scmp.ne.s32.totalorder %s181, %s182
    %p191 = scmp.eq.s32.totalorder %s19, 0
    %p192 = por %p190, %p191
    %p193 = scmp.ne.s32.totalorder %s181, %s182
    %p194 = scmp.eq.s32.totalorder %s20, 1
    %p195 = por %p193, %p194
    %p197 = scmp.ne.s32.totalorder %s182, %s196
    %p198 = scmp.eq.s32.totalorder %s20, 0
    %p199 = por %p197, %p198
    %s200 = ssub.s32 %s14, %s21
    %p201 = scmp.eq.s32.totalorder %s200, 0
    %s203 = sadd.s32 %s202, 1
    %s204 = scalar_select %p201, %s202, %s203
    %p207 = pneg %p201
    %p208 = scmp.eq.s32.totalorder %s14, 1
    %p209 = por %p207, %p208
    %p210 = scmp.ne.s32.totalorder %s202, %s205
    %p211 = scmp.eq.s32.totalorder %s14, 0
    %p212 = por %p210, %p211
    %p213 = scmp.ne.s32.totalorder %s202, %s205
    %p214 = scmp.eq.s32.totalorder %s19, 1
    %p215 = por %p213, %p214
    %p216 = scmp.ne.s32.totalorder %s205, %s206
    %p217 = scmp.eq.s32.totalorder %s19, 0
    %p218 = por %p216, %p217
    %p219 = scmp.ne.s32.totalorder %s205, %s206
    %p220 = scmp.eq.s32.totalorder %s20, 1
    %p221 = por %p219, %p220
    %p223 = scmp.ne.s32.totalorder %s206, %s222
    %p224 = scmp.eq.s32.totalorder %s20, 0
    %p225 = por %p223, %p224
    %p226 = scmp.le.s32.totalorder 1, %s14
    %p227 = scmp.lt.s32.totalorder %s14, 3
    %p228 = pnand %p226, %p227
    %p229 = pneg %p228
    // Predicated region
    $region9: #{encoder_forward.5} parent=5 // pred_check
      _
    $region10: #{encoder_forward.5} parent=5 // pred_check_branch
      %231 = sbr.rel (%p228) target = $region12
    $region11: #{encoder_forward.5} parent=5 // pred_region
      %s232 = ssub.s32 %s14, 1
      // Predicated region
      $region13: #{encoder_forward.5} parent=11 // pred_check
        %p233 = pneg %p87
      $region14: #{encoder_forward.5} parent=11 // pred_check_branch
        %235 = sbr.rel (%p233) target = $region16
      $region15: #{encoder_forward.5} parent=11 // pred_region
        _
      $region16: #{encoder_forward.5} parent=11 // pred_fallthru
        _
      // Predicated region
      $region17: #{encoder_forward.5} parent=11 // pred_check
        %p236 = pneg %p108
      $region18: #{encoder_forward.5} parent=11 // pred_check_branch
        %238 = sbr.rel (%p236) target = $region20
      $region19: #{encoder_forward.5} parent=11 // pred_region
        _
      $region20: #{encoder_forward.5} parent=11 // pred_fallthru
        _
      // Predicated region
      $region21: #{encoder_forward.5} parent=11 // pred_check
        %p239 = pneg %p129
      $region22: #{encoder_forward.5} parent=11 // pred_check_branch
        %241 = sbr.rel (%p239) target = $region24
      $region23: #{encoder_forward.5} parent=11 // pred_region
        _
      $region24: #{encoder_forward.5} parent=11 // pred_fallthru
        _
      // Predicated region
      $region25: #{encoder_forward.5} parent=11 // pred_check
        %p242 = pneg %p150
      $region26: #{encoder_forward.5} parent=11 // pred_check_branch
        %244 = sbr.rel (%p242) target = $region28
      $region27: #{encoder_forward.5} parent=11 // pred_region
        _
      $region28: #{encoder_forward.5} parent=11 // pred_fallthru
        _
      // Predicated region
      $region29: #{encoder_forward.5} parent=11 // pred_check
        %p245 = pneg %p171
      $region30: #{encoder_forward.5} parent=11 // pred_check_branch
        %247 = sbr.rel (%p245) target = $region32
      $region31: #{encoder_forward.5} parent=11 // pred_region
        _
      $region32: #{encoder_forward.5} parent=11 // pred_fallthru
        _
      // Predicated region
      $region33: #{encoder_forward.5} parent=11 // pred_check
        %p248 = pneg %p192
      $region34: #{encoder_forward.5} parent=11 // pred_check_branch
        %250 = sbr.rel (%p248) target = $region36
      $region35: #{encoder_forward.5} parent=11 // pred_region
        _
      $region36: #{encoder_forward.5} parent=11 // pred_fallthru
        _
    $region12: #{encoder_forward.5} parent=5 // pred_fallthru
      _
    %p251 = scmp.lt.s32.totalorder %s14, 2
    // Predicated region
    $region37: #{encoder_forward.5} parent=5 // pred_check
      %p252 = pneg %p251
    $region38: #{encoder_forward.5} parent=5 // pred_check_branch
      %254 = sbr.rel (%p252) target = $region40
    $region39: #{encoder_forward.5} parent=5 // pred_region
      // Predicated region
      $region41: #{encoder_forward.5} parent=39 // pred_check
        %p255 = pneg %p34
      $region42: #{encoder_forward.5} parent=39 // pred_check_branch
        %257 = sbr.rel (%p255) target = $region44
      $region43: #{encoder_forward.5} parent=39 // pred_region
        %p258 = scmp.lt.s32.totalorder %s14, 1
        %s259 = scalar_select %p258, %s14, 1
        %s260 = smul.addr %s259, 8
        %s261 = scalar_lea.vmem %s0, %s260
      $region44: #{encoder_forward.5} parent=39 // pred_fallthru
        _
      // Predicated region
      $region45: #{encoder_forward.5} parent=39 // pred_check
        %p262 = pneg %p60
      $region46: #{encoder_forward.5} parent=39 // pred_check_branch
        %264 = sbr.rel (%p262) target = $region48
      $region47: #{encoder_forward.5} parent=39 // pred_region
        %p265 = scmp.lt.s32.totalorder %s14, 1
        %s266 = scalar_select %p265, %s14, 1
        %s267 = scalar_lea.vmem %s1, %s266
      $region48: #{encoder_forward.5} parent=39 // pred_fallthru
        _
    $region40: #{encoder_forward.5} parent=5 // pred_fallthru
      _
    %p268 = scmp.le.s32.totalorder 1, %s14
    %p269 = scmp.lt.s32.totalorder %s14, 3
    %p270 = pnand %p268, %p269
    %p271 = pneg %p270
    // Predicated region
    $region49: #{encoder_forward.5} parent=5 // pred_check
      _
    $region50: #{encoder_forward.5} parent=5 // pred_check_branch
      %273 = sbr.rel (%p270) target = $region52
    $region51: #{encoder_forward.5} parent=5 // pred_region
      %s274 = ssub.s32 %s14, 1
      %p275 = scmp.lt.s32.totalorder %s19, 1
      %s276 = scalar_select %p275, %s19, 1
      %s277 = smul.addr %s276, 8
      %s278 = scalar_lea.vmem %s0, %s277
      %p279 = pneg %p40
      %p280 = pneg %p37
      %p281 = scmp.lt.s32.totalorder %s19, 1
      %s282 = scalar_select %p281, %s19, 1
      %s283 = scalar_lea.vmem %s1, %s282
      %p284 = pneg %p66
      %p285 = pneg %p63
      %p286 = pneg %p87
      %p287 = pneg %p84
      %p288 = pneg %p108
      %p289 = pneg %p105
      %p290 = pneg %p129
      %p291 = pneg %p126
      %p292 = pneg %p150
      %p293 = pneg %p147
      %p294 = pneg %p171
      %p295 = pneg %p168
      %p296 = pneg %p192
      %p297 = pneg %p189
      %p298 = pneg %p218
      %p299 = pneg %p215
      %p300 = scmp.lt.s32.totalorder %s19, 1
      %s301 = scalar_select %p300, %s19, 1
      %s302 = smul.addr %s301, 8
      %s303 = scalar_lea.vmem %s8, %s302
      %p304 = scmp.lt.s32.totalorder %s19, 1
      %s305 = scalar_select %p304, %s19, 1
      %s306 = smul.addr %s305, 8
      %s307 = scalar_lea.vmem %s0, %s306
      %p308 = scmp.lt.s32.totalorder %s19, 1
      %s309 = scalar_select %p308, %s19, 1
      %s310 = scalar_lea.vmem %s1, %s309
      %p311 = scmp.lt.s32.totalorder %s19, 1
      %s312 = scalar_select %p311, %s19, 1
      %s313 = smul.addr %s312, 8
      %s314 = scalar_lea.vmem %s8, %s313
      %v316 = vld [vmem:[%s307] sm:$0xff]
      %v317 = vld [vmem:[%s2] sm:$0x1]
      %v318 = vld [vmem:[%s3] sm:$0x1]
      %vm319 = vcmask 261120
      %v320 = vsel %vm319, %v316, 0.0
      %321 = vadd.xlane.f32.xlu0 %v320
      %v322 = vpop.xlane.xlu0 %321
      %v323 = vrcp.pop 32.0
      %v324 = vmul.f32 32.0, %v323
      %v325 = vsub.f32 1.0, %v324
      %v326 = vmul.f32 %v323, %v325
      %v327 = vadd.f32 %v323, %v326
      %vm328 = vweird.f32 %v323
      %v329 = vsel %vm328, %v323, %v327
      %v330 = vmul.f32 %v322, %v329
      %v331 = vsub.f32 %v316, %v330
      %v332 = vmul.f32 %v331, %v331
      %v333 = vsel %vm319, %v332, 0.0
      %334 = vadd.xlane.f32.xlu0 %v333
      %v335 = vpop.xlane.xlu0 %334
      %v336 = vmul.f32 %v335, 0.032258064
      %v337 = vrsqrt.pop %v336
      %v338 = vmul.f32 %v337, %v336
      %v339 = vmul.f32 %v338, %v337
      %v340 = vmul.f32 0.5, %v339
      %v341 = vsub.f32 1.5, %v340
      %v342 = vmul.f32 %v337, %v341
      %v343 = vmul.f32 %v336, %v342
      %vm344 = vcmp.eq.f32.partialorder %v336, inf
      %v345 = vsel %vm344, %v336, %v343
      %vm346 = vcmp.eq.f32.partialorder %v336, 0.0
      %v347 = vand.u32 %v336, 2147483648
      %v348 = vsel %vm346, %v347, %v345
      %v349 = vadd.f32 %v348, 1e-06
      %v350 = vrcp.pop %v349
      %v352 = vperm.slane %v317, 0
      %v354 = vmul.f32 %v352, %v331
      %v355 = vmul.f32 %v354, %v350
      %v357 = vperm.slane %v318, 0
      %v359 = vadd.f32 %v355, %v357
      %v360 = vpack.c.bf16 %v359, %v359
      %v361 = vld [vmem:[%s4] sm:$0xf]
      %v362 = vld [vmem:[%s4 + $0x4] sm:$0xf]
      %v363 = vld [vmem:[%s4 + $0x8] sm:$0xf]
      %v364 = vld [vmem:[%s4 + $0xc] sm:$0xf]
      %v365 = vld [vmem:[%s5] sm:$0x1]
      %v367 = vperm.slane %v365, 0
      %v373 = vunpack.c.l.b16 %v361
      %v374 = vunpack.c.l.b16 %v362
      %v375 = vunpack.c.l.b16 %v363
      %v376 = vunpack.c.l.b16 %v364
      %v377 = vpack.c.b16 %v374, %v373
      %v378 = vpack.c.b16 %v376, %v375
      %v382 = vsel %vm319, %v360, 0
      %384 = vmatpush.bf16.msra.mxu0 0
      %385 = vmatpush.bf16.msra.mxu0 0
      %386 = vmatpush.bf16.msra.mxu0 0
      %387 = vmatpush.bf16.msra.mxu0 0
      %388 = vmatpush.bf16.msra.mxu0 0
      %389 = vmatpush.bf16.msra.mxu0 0
      %390 = vmatpush.bf16.msra.mxu0 %v378
      %391 = vmatpush.bf16.msra.mxu0 %v377
      %392 = vmatmul.bf16.gmra.mxu0 %v382
      %v393 = vpop.f32.mrf.mxu0
      %v394 = vadd.f32 %v367, %v393
      %v395 = vpop.f32.mrf.mxu0
      %396 = vdwg.mxu0
      %v397 = vld [vmem:[%s310] sm:$0x1]
      %v398 = vpack.c.bf16 %v394, %v394
      %400 = vrot.lane.b32.xlu0 %v398, 96
      %v401 = vpop.permute.xlu0 %400
      %vm402 = vcmask 64512
      %v404 = vsel %vm402, %v398, 0
      %v407 = vsel %vm402, %v401, 0
      %409 = vmatpush.bf16.xpose.msra.mxu0 0
      %410 = vmatpush.bf16.xpose.msra.mxu0 0
      %411 = vmatpush.bf16.xpose.msra.mxu0 0
      %412 = vmatpush.bf16.xpose.msra.mxu0 0
      %413 = vmatpush.bf16.xpose.msra.mxu0 0
      %414 = vmatpush.bf16.xpose.msra.mxu0 0
      %415 = vmatpush.bf16.xpose.msra.mxu0 0
      %416 = vmatpush.bf16.xpose.msra.mxu0 %v407
      %417 = vmatmul.bf16.gmra.mxu0 %v404
      %v418 = vpop.f32.mrf.mxu0
      %v419 = vadd.f32 0.0, %v418
      %v420 = vpop.f32.mrf.mxu0
      %421 = vdwg.mxu0
      %v422 = vmul.f32 %v419, 0.35355338
      %vm423 = vcmp.eq.f32.partialorder %v397, 0.0
      %v424 = vsel %vm423, 1, 0
      %v425 = vperm.slane %v424, 0
      %vm426 = vcmp.eq.s32.totalorder %v425, 1
      %v427 = vsel %vm426, -1e+09, %v422
      %v428 = vsel %vm402, %v427, -inf
      %429 = vmax.xlane.f32.xlu0 %v428
      %v430 = vpop.xlane.xlu0 %429
      %v431 = vsub.f32 %v427, %v430
      %v432 = vmul.f32 %v431, 1.442695
      %v433 = vpow.pop %v432
      %v434 = vsel %vm402, %v433, 0.0
      %435 = vadd.xlane.f32.xlu0 %v434
      %v436 = vpop.xlane.xlu0 %435
      %v437 = vrcp.pop %v436
      %v438 = vmul.f32 %v433, %v437
      %v439 = vpack.c.bf16 %v438, %v438
      %440 = vrot.lane.b32.xlu0 %v398, 64
      %v441 = vpop.permute.xlu0 %440
      %v443 = vsel %vm402, %v439, 0
      %vm445 = vcmask 1043456
      %v447 = vsel %vm445, %v441, 0
      %449 = vmatpush.bf16.msra.mxu0 0
      %450 = vmatpush.bf16.msra.mxu0 0
      %451 = vmatpush.bf16.msra.mxu0 0
      %452 = vmatpush.bf16.msra.mxu0 0
      %453 = vmatpush.bf16.msra.mxu0 0
      %454 = vmatpush.bf16.msra.mxu0 0
      %455 = vmatpush.bf16.msra.mxu0 0
      %456 = vmatpush.bf16.msra.mxu0 %v447
      %457 = vmatmul.bf16.gmra.mxu0 %v443
      %v458 = vpop.f32.mrf.mxu0
      %v459 = vadd.f32 0.0, %v458
      %v460 = vpop.f32.mrf.mxu0
      %461 = vdwg.mxu0
      %462 = vrot.lane.b32.xlu0 %v398, 120
      %v463 = vpop.permute.xlu0 %462
      %464 = vrot.lane.b32.xlu0 %v398, 88
      %v465 = vpop.permute.xlu0 %464
      %v467 = vsel %vm402, %v463, 0
      %v470 = vsel %vm402, %v465, 0
      %472 = vmatpush.bf16.xpose.msra.mxu0 0
      %473 = vmatpush.bf16.xpose.msra.mxu0 0
      %474 = vmatpush.bf16.xpose.msra.mxu0 0
      %475 = vmatpush.bf16.xpose.msra.mxu0 0
      %476 = vmatpush.bf16.xpose.msra.mxu0 0
      %477 = vmatpush.bf16.xpose.msra.mxu0 0
      %478 = vmatpush.bf16.xpose.msra.mxu0 0
      %479 = vmatpush.bf16.xpose.msra.mxu0 %v470
      %480 = vmatmul.bf16.gmra.mxu0 %v467
      %v481 = vpop.f32.mrf.mxu0
      %v482 = vadd.f32 0.0, %v481
      %v483 = vpop.f32.mrf.mxu0
      %484 = vdwg.mxu0
      %v485 = vmul.f32 %v482, 0.35355338
      %v486 = vsel %vm426, -1e+09, %v485
      %v487 = vsel %vm402, %v486, -inf
      %488 = vmax.xlane.f32.xlu0 %v487
      %v489 = vpop.xlane.xlu0 %488
      %v490 = vsub.f32 %v486, %v489
      %v491 = vmul.f32 %v490, 1.442695
      %v492 = vpow.pop %v491
      %v493 = vsel %vm402, %v492, 0.0
      %494 = vadd.xlane.f32.xlu0 %v493
      %v495 = vpop.xlane.xlu0 %494
      %v496 = vrcp.pop %v495
      %v497 = vmul.f32 %v492, %v496
      %v498 = vpack.c.bf16 %v497, %v497
      %499 = vrot.lane.b32.xlu0 %v398, 56
      %v500 = vpop.permute.xlu0 %499
      %v502 = vsel %vm402, %v498, 0
      %v505 = vsel %vm445, %v500, 0
      %507 = vmatpush.bf16.msra.mxu0 0
      %508 = vmatpush.bf16.msra.mxu0 0
      %509 = vmatpush.bf16.msra.mxu0 0
      %510 = vmatpush.bf16.msra.mxu0 0
      %511 = vmatpush.bf16.msra.mxu0 0
      %512 = vmatpush.bf16.msra.mxu0 0
      %513 = vmatpush.bf16.msra.mxu0 0
      %514 = vmatpush.bf16.msra.mxu0 %v505
      %515 = vmatmul.bf16.gmra.mxu0 %v502
      %v516 = vpop.f32.mrf.mxu0
      %v517 = vadd.f32 0.0, %v516
      %v518 = vpop.f32.mrf.mxu0
      %519 = vdwg.mxu0
      %520 = vrot.lane.b32.xlu0 %v398, 112
      %v521 = vpop.permute.xlu0 %520
      %522 = vrot.lane.b32.xlu0 %v398, 80
      %v523 = vpop.permute.xlu0 %522
      %v525 = vsel %vm402, %v521, 0
      %v528 = vsel %vm402, %v523, 0
      %530 = vmatpush.bf16.xpose.msra.mxu0 0
      %531 = vmatpush.bf16.xpose.msra.mxu0 0
      %532 = vmatpush.bf16.xpose.msra.mxu0 0
      %533 = vmatpush.bf16.xpose.msra.mxu0 0
      %534 = vmatpush.bf16.xpose.msra.mxu0 0
      %535 = vmatpush.bf16.xpose.msra.mxu0 0
      %536 = vmatpush.bf16.xpose.msra.mxu0 0
      %537 = vmatpush.bf16.xpose.msra.mxu0 %v528
      %538 = vmatmul.bf16.gmra.mxu0 %v525
      %v539 = vpop.f32.mrf.mxu0
      %v540 = vadd.f32 0.0, %v539
      %v541 = vpop.f32.mrf.mxu0
      %542 = vdwg.mxu0
      %v543 = vmul.f32 %v540, 0.35355338
      %v544 = vsel %vm426, -1e+09, %v543
      %v545 = vsel %vm402, %v544, -inf
      %546 = vmax.xlane.f32.xlu0 %v545
      %v547 = vpop.xlane.xlu0 %546
      %v548 = vsub.f32 %v544, %v547
      %v549 = vmul.f32 %v548, 1.442695
      %v550 = vpow.pop %v549
      %v551 = vsel %vm402, %v550, 0.0
      %552 = vadd.xlane.f32.xlu0 %v551
      %v553 = vpop.xlane.xlu0 %552
      %v554 = vrcp.pop %v553
      %v555 = vmul.f32 %v550, %v554
      %v556 = vpack.c.bf16 %v555, %v555
      %557 = vrot.lane.b32.xlu0 %v398, 48
      %v558 = vpop.permute.xlu0 %557
      %v560 = vsel %vm402, %v556, 0
      %v563 = vsel %vm445, %v558, 0
      %565 = vmatpush.bf16.msra.mxu0 0
      %566 = vmatpush.bf16.msra.mxu0 0
      %567 = vmatpush.bf16.msra.mxu0 0
      %568 = vmatpush.bf16.msra.mxu0 0
      %569 = vmatpush.bf16.msra.mxu0 0
      %570 = vmatpush.bf16.msra.mxu0 0
      %571 = vmatpush.bf16.msra.mxu0 0
      %572 = vmatpush.bf16.msra.mxu0 %v563
      %573 = vmatmul.bf16.gmra.mxu0 %v560
      %v574 = vpop.f32.mrf.mxu0
      %v575 = vadd.f32 0.0, %v574
      %v576 = vpop.f32.mrf.mxu0
      %577 = vdwg.mxu0
      %578 = vrot.lane.b32.xlu0 %v398, 104
      %v579 = vpop.permute.xlu0 %578
      %580 = vrot.lane.b32.xlu0 %v398, 72
      %v581 = vpop.permute.xlu0 %580
      %v583 = vsel %vm402, %v579, 0
      %v586 = vsel %vm402, %v581, 0
      %588 = vmatpush.bf16.xpose.msra.mxu0 0
      %589 = vmatpush.bf16.xpose.msra.mxu0 0
      %590 = vmatpush.bf16.xpose.msra.mxu0 0
      %591 = vmatpush.bf16.xpose.msra.mxu0 0
      %592 = vmatpush.bf16.xpose.msra.mxu0 0
      %593 = vmatpush.bf16.xpose.msra.mxu0 0
      %594 = vmatpush.bf16.xpose.msra.mxu0 0
      %595 = vmatpush.bf16.xpose.msra.mxu0 %v586
      %596 = vmatmul.bf16.gmra.mxu0 %v583
      %v597 = vpop.f32.mrf.mxu0
      %v598 = vadd.f32 0.0, %v597
      %v599 = vpop.f32.mrf.mxu0
      %600 = vdwg.mxu0
      %v601 = vmul.f32 %v598, 0.35355338
      %v602 = vsel %vm426, -1e+09, %v601
      %v603 = vsel %vm402, %v602, -inf
      %604 = vmax.xlane.f32.xlu0 %v603
      %v605 = vpop.xlane.xlu0 %604
      %v606 = vsub.f32 %v602, %v605
      %v607 = vmul.f32 %v606, 1.442695
      %v608 = vpow.pop %v607
      %v609 = vsel %vm402, %v608, 0.0
      %610 = vadd.xlane.f32.xlu0 %v609
      %v611 = vpop.xlane.xlu0 %610
      %v612 = vrcp.pop %v611
      %v613 = vmul.f32 %v608, %v612
      %v614 = vpack.c.bf16 %v613, %v613
      %615 = vrot.lane.b32.xlu0 %v398, 40
      %v616 = vpop.permute.xlu0 %615
      %v618 = vsel %vm402, %v614, 0
      %v621 = vsel %vm445, %v616, 0
      %623 = vmatpush.bf16.msra.mxu0 0
      %624 = vmatpush.bf16.msra.mxu0 0
      %625 = vmatpush.bf16.msra.mxu0 0
      %626 = vmatpush.bf16.msra.mxu0 0
      %627 = vmatpush.bf16.msra.mxu0 0
      %628 = vmatpush.bf16.msra.mxu0 0
      %629 = vmatpush.bf16.msra.mxu0 0
      %630 = vmatpush.bf16.msra.mxu0 %v621
      %631 = vmatmul.bf16.gmra.mxu0 %v618
      %v632 = vpop.f32.mrf.mxu0
      %v633 = vadd.f32 0.0, %v632
      %v634 = vpop.f32.mrf.mxu0
      %635 = vdwg.mxu0
      %637 = vrot.lane.b32.xlu0 %v517, 8
      %v638 = vpop.permute.xlu0 %637
      %641 = vrot.lane.b32.xlu0 %v575, 16
      %v642 = vpop.permute.xlu0 %641
      %645 = vrot.lane.b32.xlu0 %v633, 24
      %v646 = vpop.permute.xlu0 %645
      %v648 = vsel %vm402, %v459, %v638
      %vm649 = vcmask 130048
      %v650 = vsel %vm649, %v648, %v642
      %vm651 = vcmask 195584
      %v652 = vsel %vm651, %v650, %v646
      %v653 = vpack.c.bf16 %v652, %v652
      %v654 = vld [vmem:[%s6] sm:$0xf]
      %v655 = vld [vmem:[%s6 + $0x4] sm:$0xf]
      %v656 = vld [vmem:[%s6 + $0x8] sm:$0xf]
      %v657 = vld [vmem:[%s6 + $0xc] sm:$0xf]
      %v658 = vld [vmem:[%s7] sm:$0x1]
      %v660 = vperm.slane %v658, 0
      %v666 = vunpack.c.l.b16 %v654
      %v667 = vunpack.c.l.b16 %v655
      %v668 = vunpack.c.l.b16 %v656
      %v669 = vunpack.c.l.b16 %v657
      %v670 = vpack.c.b16 %v667, %v666
      %v671 = vpack.c.b16 %v669, %v668
      %v675 = vsel %vm319, %v653, 0
      %677 = vmatpush.bf16.msra.mxu0 0
      %678 = vmatpush.bf16.msra.mxu0 0
      %679 = vmatpush.bf16.msra.mxu0 0
      %680 = vmatpush.bf16.msra.mxu0 0
      %681 = vmatpush.bf16.msra.mxu0 0
      %682 = vmatpush.bf16.msra.mxu0 0
      %683 = vmatpush.bf16.msra.mxu0 %v671
      %684 = vmatpush.bf16.msra.mxu0 %v670
      %685 = vmatmul.bf16.gmra.mxu0 %v675
      %v686 = vpop.f32.mrf.mxu0
      %v687 = vadd.f32 %v660, %v686
      %v688 = vpop.f32.mrf.mxu0
      %689 = vdwg.mxu0
      %v690 = vadd.f32 %v316, %v687
      %691 = vst.msk [vmem:[%s314] sm:$0xff] %vm319, %v690
      %p692 = scmp.lt.s32.totalorder %s19, 1
      %s693 = scalar_select %p692, %s19, 1
      %s694 = smul.addr %s693, 8
      %s695 = scalar_lea.vmem %s8, %s694
      // Predicated region
      $region53: #{encoder_forward.5} parent=51 // pred_check
        %p696 = pneg %p215
      $region54: #{encoder_forward.5} parent=51 // pred_check_branch
        %698 = sbr.rel (%p696) target = $region56
      $region55: #{encoder_forward.5} parent=51 // pred_region
        _
      $region56: #{encoder_forward.5} parent=51 // pred_fallthru
        _
    $region52: #{encoder_forward.5} parent=5 // pred_fallthru
      _
    %p699 = scmp.le.s32.totalorder 2, %s14
    // Predicated region
    $region57: #{encoder_forward.5} parent=5 // pred_check
      %p700 = pneg %p699
    $region58: #{encoder_forward.5} parent=5 // pred_check_branch
      %702 = sbr.rel (%p700) target = $region60
    $region59: #{encoder_forward.5} parent=5 // pred_region
      %s703 = ssub.s32 %s14, 2
      // Predicated region
      $region61: #{encoder_forward.5} parent=59 // pred_check
        %p704 = pneg %p221
      $region62: #{encoder_forward.5} parent=59 // pred_check_branch
        %706 = sbr.rel (%p704) target = $region64
      $region63: #{encoder_forward.5} parent=59 // pred_region
        %p707 = scmp.lt.s32.totalorder %s20, 1
        %s708 = scalar_select %p707, %s20, 1
        %s709 = smul.addr %s708, 8
        %s710 = scalar_lea.vmem %s8, %s709
      $region64: #{encoder_forward.5} parent=59 // pred_fallthru
        _
    $region60: #{encoder_forward.5} parent=5 // pred_fallthru
      _
  $region6: #{encoder_forward.5} parent=0 // loop_footer
    %s18 = sadd.s32 1, %s14
  $region7: #{encoder_forward.5} parent=0 // loop_footer_branch
    %13 = sbr.rel target = $region3
  $region8: #{encoder_forward.5} parent=0 // loop_exit
    _

</llo_original>
